<compile_context>
chip_gen: v7x
topology: tpu7x:2x2x1
jax: 0.10.0
libtpu: 0.0.40
codegen_flags: <defaults>
</compile_context>

<pallas_src>
import jax
import jax.numpy as jnp
from jax import lax
from jax.experimental import pallas as pl
from jax.experimental.pallas import tpu as pltpu


def _mlp_kernel(x_ref, w1_ref, b1_ref, w2_ref, b2_ref,
                w3_ref, b3_ref, w4_ref, b4_ref, out_ref):
    x = x_ref[...]                                    # (TB, 3)  f32
    w1 = w1_ref[...]                                  # (3, 64)  f32 (cols 18..63 are 0)

    # fc1 on the VPU: a (TB,3)@(3,64) matmul is <2% MXU utilization, so use three
    # broadcast FMAs across the 64 lanes instead.  Bias/ReLU in f32 (safe on v5e).
    h1 = (x[:, 0:1] * w1[0:1, :]
          + x[:, 1:2] * w1[1:2, :]
          + x[:, 2:3] * w1[2:3, :]
          + b1_ref[...])
    h1 = jnp.maximum(h1, 0.0)                         # (TB, 64) f32

    # fc2: bf16 MXU matmul with f32 accumulation; elementwise stays f32.
    h2 = jnp.dot(h1.astype(jnp.bfloat16), w2_ref[...],
                 preferred_element_type=jnp.float32)  # (TB, 128)
    h2 = jnp.maximum(h2 + b2_ref[...], 0.0)

    # fc3: bf16 MXU matmul with f32 accumulation.
    h3 = jnp.dot(h2.astype(jnp.bfloat16), w3_ref[...],
                 preferred_element_type=jnp.float32)  # (TB, 64)
    h3 = jnp.maximum(h3 + b3_ref[...], 0.0)           # (TB, 64) f32

    # fc4 (N=1), lane-dense: contract the 64-dim axis of h3 against the (zero-padded
    # to 8 rows) w4 so the result comes out row-major (rows -> lanes).  This is a tiny
    # f32 matmul (MXU has huge slack here) and avoids a (TB,1) column output that
    # would otherwise need TB/8 masked single-lane stores.
    z = lax.dot_general(
        w4_ref[...], h3,                              # (8,64) , (TB,64)
        dimension_numbers=(((1,), (1,)), ((), ())),   # contract both last dims
        preferred_element_type=jnp.float32)           # (8, TB); only row 0 is real
    row = z[0:1, :] + b4_ref[...]                     # (1, TB)
    out_ref[...] = row.reshape(out_ref.shape)         # (1, 1, TB) lane-dense slab


def _round_up(n, m):
    return ((n + m - 1) // m) * m


def depth_refinement_forward(x, params, *, tile_b=2048):
    """x: (B, 3) float32. params: dict of PyTorch-shaped Linear weights."""
    x = x.astype(jnp.float32)
    B = x.shape[0]

    # --- host-side glue: lane-clean weight layouts ---------------------------
    # fc1 weights/bias zero-padded to out-width 64; full fc2 weight used.
    w1_t = jnp.zeros((3, 64), jnp.float32).at[:, :18].set(
        params["w1"].T.astype(jnp.float32))                    # (3, 64)
    b1 = jnp.zeros((1, 64), jnp.float32).at[:, :18].set(
        params["b1"].astype(jnp.float32).reshape(1, -1))       # (1, 64)
    w2_t = params["w2"].T.astype(jnp.bfloat16)                 # (64, 128) bf16
    b2 = params["b2"].astype(jnp.float32).reshape(1, -1)       # (1, 128)
    w3_t = params["w3"].T.astype(jnp.bfloat16)                 # (128, 64) bf16
    b3 = params["b3"].astype(jnp.float32).reshape(1, -1)       # (1, 64)
    # fc4 weight padded to 8 rows (only row 0 meaningful) so the in-kernel
    # lane-dense dot has a sublane-clean LHS.
    w4_rows = jnp.zeros((8, 64), jnp.float32).at[0].set(
        params["w4"].astype(jnp.float32).reshape(-1))          # (8, 64)
    b4 = params["b4"].astype(jnp.float32).reshape(1, 1)        # (1, 1)

    # --- batch tiling ---------------------------------------------------------
    # Big tiles amortize the ~600-cycle per-grid-step overhead; multiple of 256.
    tile_b = max(256, (int(tile_b) // 256) * 256)
    tile_b = min(tile_b, _round_up(max(B, 1), 256))   # never bigger than padded batch
    if B > 256:
        # Keep >= 2 tiles so both v7x TensorCores get work via the "parallel" axis.
        tile_b = min(tile_b, max(256, _round_up(pl.cdiv(B, 2), 256)))
    num_tiles = pl.cdiv(B, tile_b)
    b_pad = num_tiles * tile_b
    if b_pad != B:
        x = jnp.pad(x, ((0, b_pad - B), (0, 0)))      # tail tile padded with zeros

    def const(shape):
        nd = len(shape)
        return pl.BlockSpec(shape, lambda i, _nd=nd: (0,) * _nd)  # VMEM-resident

    flops = 2 * b_pad * (3 * 64 + 64 * 128 + 128 * 64 + 64)
    bytes_accessed = (b_pad * (3 + 1) * 4                        # x in + z out
                      + (3 * 64 + 64 + 128 + 64 + 8 * 64 + 1) * 4
                      + (64 * 128 + 128 * 64) * 2)               # bf16 weights

    out = pl.pallas_call(
        _mlp_kernel,
        out_shape=jax.ShapeDtypeStruct((num_tiles, 1, tile_b), jnp.float32),
        grid=(num_tiles,),
        in_specs=[
            pl.BlockSpec((tile_b, 3), lambda i: (i, 0)),   # x tile
            const((3, 64)), const((1, 64)),                # fc1
            const((64, 128)), const((1, 128)),             # fc2
            const((128, 64)), const((1, 64)),              # fc3
            const((8, 64)), const((1, 1)),                 # fc4
        ],
        out_specs=pl.BlockSpec((1, 1, tile_b), lambda i: (i, 0, 0)),  # lane-dense slab
        compiler_params=pltpu.CompilerParams(
            dimension_semantics=("parallel",),             # shard batch over TCs (v7x)
            vmem_limit_bytes=32 * 1024 * 1024,             # headroom for big tiles;
                                                           # still under v7x 64 MiB phys
        ),
        cost_estimate=pl.CostEstimate(
            flops=flops, transcendentals=0, bytes_accessed=bytes_accessed),
    )(x, w1_t, b1, w2_t, b2, w3_t, b3, w4_rows, b4)

    return out.reshape(b_pad, 1)[:B]                       # (B, 1)


def init_params(key):
    """Deterministic init mimicking PyTorch Linear default (U[-1/sqrt(fan_in), +])."""
    def linear(key, out_f, in_f):
        kw, kb = jax.random.split(key)
        bound = 1.0 / jnp.sqrt(in_f)
        w = jax.random.uniform(kw, (out_f, in_f), jnp.float32, -bound, bound)
        b = jax.random.uniform(kb, (out_f,), jnp.float32, -bound, bound)
        return w, b

    k1, k2, k3, k4 = jax.random.split(key, 4)
    w1, b1 = linear(k1, 18, 3)     # fc1: Linear(3, 18)
    w2, b2 = linear(k2, 128, 64)   # fc2: Linear(64, 128)
    w3, b3 = linear(k3, 64, 128)   # fc3: Linear(128, 64)
    w4, b4 = linear(k4, 1, 64)     # fc4: Linear(64, 1)
    return dict(w1=w1, b1=b1, w2=w2, b2=b2, w3=w3, b3=b3, w4=w4, b4=b4)


def reference_forward(x, params):
    """Plain-JAX f32 reference with identical (zero-pad) semantics."""
    x = x.astype(jnp.float32)
    h = jnp.maximum(x @ params["w1"].T + params["b1"], 0.0)          # (B, 18)
    h = jnp.pad(h, ((0, 0), (0, 64 - 18)))                           # (B, 64)
    h = jnp.maximum(h @ params["w2"].T + params["b2"], 0.0)          # (B, 128)
    h = jnp.maximum(h @ params["w3"].T + params["b3"], 0.0)          # (B, 64)
    return h @ params["w4"].T + params["b4"]                         # (B, 1)


if __name__ == "__main__":
    key = jax.random.PRNGKey(0)
    kp, kx = jax.random.split(key)

    params = init_params(kp)
    # Small demo batch that still exercises multiple grid steps (the >=2-tile cap
    # picks tile_b=256 here -> 2 tiles) and the non-divisible-batch padding path.
    B = 300
    x = jax.random.normal(kx, (B, 3), dtype=jnp.float32)

    out = depth_refinement_forward(x, params)
    out = jax.block_until_ready(out)

    ref = reference_forward(x, params)
    assert out.shape == (B, 1)
    # Relaxed tolerance: fc2/fc3 use bf16 MXU operands (f32 accumulation).
    assert jnp.allclose(out, ref, atol=2e-2, rtol=2e-2), float(
        jnp.max(jnp.abs(out - ref)))

    print("KERNEL_OK")
</pallas_src>

<mosaic_0001>
module attributes {stable_mosaic.version = 11 : i64} {
  func.func @_mlp_kernel(%arg0: i32, %arg1: memref<256x3xf32, #tpu.memory_space<vmem>>, %arg2: memref<3x64xf32, #tpu.memory_space<vmem>>, %arg3: memref<1x64xf32, #tpu.memory_space<vmem>>, %arg4: memref<64x128xbf16, #tpu.memory_space<vmem>>, %arg5: memref<1x128xf32, #tpu.memory_space<vmem>>, %arg6: memref<128x64xbf16, #tpu.memory_space<vmem>>, %arg7: memref<1x64xf32, #tpu.memory_space<vmem>>, %arg8: memref<8x64xf32, #tpu.memory_space<vmem>>, %arg9: memref<1x1xf32, #tpu.memory_space<vmem>>, %arg10: memref<1x1x256xf32, #tpu.memory_space<vmem>>) attributes {dimension_semantics = [#tpu.dimension_semantics<parallel>], iteration_bounds = array<i64: 2>, scalar_prefetch = 0 : i64, scratch_operands = 0 : i64, tpu.core_type = #tpu.core_type<tc>, window_params = [{transform_indices = @transform_0, window_bounds = array<i64: 256, 3>}, {pipeline_mode = #tpu.pipeline_mode<synchronous>, transform_indices = @transform_1, window_bounds = array<i64: 3, 64>}, {pipeline_mode = #tpu.pipeline_mode<synchronous>, transform_indices = @transform_2, window_bounds = array<i64: 1, 64>}, {pipeline_mode = #tpu.pipeline_mode<synchronous>, transform_indices = @transform_3, window_bounds = array<i64: 64, 128>}, {pipeline_mode = #tpu.pipeline_mode<synchronous>, transform_indices = @transform_4, window_bounds = array<i64: 1, 128>}, {pipeline_mode = #tpu.pipeline_mode<synchronous>, transform_indices = @transform_5, window_bounds = array<i64: 128, 64>}, {pipeline_mode = #tpu.pipeline_mode<synchronous>, transform_indices = @transform_6, window_bounds = array<i64: 1, 64>}, {pipeline_mode = #tpu.pipeline_mode<synchronous>, transform_indices = @transform_7, window_bounds = array<i64: 8, 64>}, {pipeline_mode = #tpu.pipeline_mode<synchronous>, transform_indices = @transform_8, window_bounds = array<i64: 1, 1>}, {transform_indices = @transform_9, window_bounds = array<i64: 1, 1, 256>}]} {
    %c0 = arith.constant 0 : index
    %c0_0 = arith.constant 0 : index
    %0 = vector.load %arg1[%c0, %c0_0] : memref<256x3xf32, #tpu.memory_space<vmem>>, vector<256x3xf32>
    %c0_1 = arith.constant 0 : index
    %c0_2 = arith.constant 0 : index
    %1 = vector.load %arg2[%c0_1, %c0_2] : memref<3x64xf32, #tpu.memory_space<vmem>>, vector<3x64xf32>
    %2 = vector.extract_strided_slice %0 {offsets = [0, 0], sizes = [256, 1], strides = [1, 1]} : vector<256x3xf32> to vector<256x1xf32>
    %3 = vector.extract_strided_slice %1 {offsets = [0, 0], sizes = [1, 64], strides = [1, 1]} : vector<3x64xf32> to vector<1x64xf32>
    %4 = vector.broadcast %2 : vector<256x1xf32> to vector<256x64xf32>
    %5 = vector.broadcast %3 : vector<1x64xf32> to vector<256x64xf32>
    %6 = arith.mulf %4, %5 : vector<256x64xf32>
    %7 = vector.extract_strided_slice %0 {offsets = [0, 1], sizes = [256, 1], strides = [1, 1]} : vector<256x3xf32> to vector<256x1xf32>
    %8 = vector.extract_strided_slice %1 {offsets = [1, 0], sizes = [1, 64], strides = [1, 1]} : vector<3x64xf32> to vector<1x64xf32>
    %9 = vector.broadcast %7 : vector<256x1xf32> to vector<256x64xf32>
    %10 = vector.broadcast %8 : vector<1x64xf32> to vector<256x64xf32>
    %11 = arith.mulf %9, %10 : vector<256x64xf32>
    %12 = arith.addf %6, %11 : vector<256x64xf32>
    %13 = vector.extract_strided_slice %0 {offsets = [0, 2], sizes = [256, 1], strides = [1, 1]} : vector<256x3xf32> to vector<256x1xf32>
    %14 = vector.extract_strided_slice %1 {offsets = [2, 0], sizes = [1, 64], strides = [1, 1]} : vector<3x64xf32> to vector<1x64xf32>
    %15 = vector.broadcast %13 : vector<256x1xf32> to vector<256x64xf32>
    %16 = vector.broadcast %14 : vector<1x64xf32> to vector<256x64xf32>
    %17 = arith.mulf %15, %16 : vector<256x64xf32>
    %18 = arith.addf %12, %17 : vector<256x64xf32>
    %c0_3 = arith.constant 0 : index
    %c0_4 = arith.constant 0 : index
    %19 = vector.load %arg3[%c0_3, %c0_4] : memref<1x64xf32, #tpu.memory_space<vmem>>, vector<1x64xf32>
    %20 = vector.broadcast %19 : vector<1x64xf32> to vector<256x64xf32>
    %21 = arith.addf %18, %20 : vector<256x64xf32>
    %cst = arith.constant 0.000000e+00 : f32
    %22 = vector.broadcast %cst : f32 to vector<256x64xf32>
    %23 = arith.maximumf %21, %22 : vector<256x64xf32>
    %24 = arith.truncf %23 : vector<256x64xf32> to vector<256x64xbf16>
    %c0_5 = arith.constant 0 : index
    %c0_6 = arith.constant 0 : index
    %25 = vector.load %arg4[%c0_5, %c0_6] : memref<64x128xbf16, #tpu.memory_space<vmem>>, vector<64x128xbf16>
    %cst_7 = arith.constant dense<0.000000e+00> : vector<256x128xf32>
    %26 = tpu.matmul %24, %25, %cst_7 {dimension_numbers = #tpu.dot_dimension_numbers<[1], [0], [0], [1], [0, 0, 1, 1], [], []>} : vector<256x64xbf16>, vector<64x128xbf16>, vector<256x128xf32> -> vector<256x128xf32>
    %c0_8 = arith.constant 0 : index
    %c0_9 = arith.constant 0 : index
    %27 = vector.load %arg5[%c0_8, %c0_9] : memref<1x128xf32, #tpu.memory_space<vmem>>, vector<1x128xf32>
    %28 = vector.broadcast %27 : vector<1x128xf32> to vector<256x128xf32>
    %29 = arith.addf %26, %28 : vector<256x128xf32>
    %cst_10 = arith.constant 0.000000e+00 : f32
    %30 = vector.broadcast %cst_10 : f32 to vector<256x128xf32>
    %31 = arith.maximumf %29, %30 : vector<256x128xf32>
    %32 = arith.truncf %31 : vector<256x128xf32> to vector<256x128xbf16>
    %c0_11 = arith.constant 0 : index
    %c0_12 = arith.constant 0 : index
    %33 = vector.load %arg6[%c0_11, %c0_12] : memref<128x64xbf16, #tpu.memory_space<vmem>>, vector<128x64xbf16>
    %cst_13 = arith.constant dense<0.000000e+00> : vector<256x64xf32>
    %34 = tpu.matmul %32, %33, %cst_13 {dimension_numbers = #tpu.dot_dimension_numbers<[1], [0], [0], [1], [0, 0, 1, 1], [], []>} : vector<256x128xbf16>, vector<128x64xbf16>, vector<256x64xf32> -> vector<256x64xf32>
    %c0_14 = arith.constant 0 : index
    %c0_15 = arith.constant 0 : index
    %35 = vector.load %arg7[%c0_14, %c0_15] : memref<1x64xf32, #tpu.memory_space<vmem>>, vector<1x64xf32>
    %36 = vector.broadcast %35 : vector<1x64xf32> to vector<256x64xf32>
    %37 = arith.addf %34, %36 : vector<256x64xf32>
    %cst_16 = arith.constant 0.000000e+00 : f32
    %38 = vector.broadcast %cst_16 : f32 to vector<256x64xf32>
    %39 = arith.maximumf %37, %38 : vector<256x64xf32>
    %c0_17 = arith.constant 0 : index
    %c0_18 = arith.constant 0 : index
    %40 = vector.load %arg8[%c0_17, %c0_18] : memref<8x64xf32, #tpu.memory_space<vmem>>, vector<8x64xf32>
    %cst_19 = arith.constant dense<0.000000e+00> : vector<8x256xf32>
    %41 = tpu.matmul %40, %39, %cst_19 {dimension_numbers = #tpu.dot_dimension_numbers<[1], [1], [0], [0], [0, 0, 1, 0], [], []>} : vector<8x64xf32>, vector<256x64xf32>, vector<8x256xf32> -> vector<8x256xf32>
    %42 = vector.extract_strided_slice %41 {offsets = [0, 0], sizes = [1, 256], strides = [1, 1]} : vector<8x256xf32> to vector<1x256xf32>
    %c0_20 = arith.constant 0 : index
    %c0_21 = arith.constant 0 : index
    %43 = vector.load %arg9[%c0_20, %c0_21] : memref<1x1xf32, #tpu.memory_space<vmem>>, vector<1x1xf32>
    %44 = vector.broadcast %43 : vector<1x1xf32> to vector<1x256xf32>
    %45 = arith.addf %42, %44 : vector<1x256xf32>
    %46 = vector.shape_cast %45 : vector<1x256xf32> to vector<1x1x256xf32>
    %c0_22 = arith.constant 0 : index
    %c0_23 = arith.constant 0 : index
    %c0_24 = arith.constant 0 : index
    %47 = vector.load %arg10[%c0_22, %c0_23, %c0_24] : memref<1x1x256xf32, #tpu.memory_space<vmem>>, vector<1x1x256xf32>
    tpu.vector_store %arg10[%c0_22, %c0_23, %c0_24], %46 {strides = array<i32>} : memref<1x1x256xf32, #tpu.memory_space<vmem>>, vector<1x1x256xf32>,
    return
  }
  func.func @transform_0(%arg0: i32) -> (i32, i32) {
    %c0_i32 = arith.constant 0 : i32
    %c0_i32_0 = arith.constant 0 : i32
    return %arg0, %c0_i32 : i32, i32
  }
  func.func @transform_1(%arg0: i32) -> (i32, i32) {
    %c0_i32 = arith.constant 0 : i32
    %c0_i32_0 = arith.constant 0 : i32
    %c0_i32_1 = arith.constant 0 : i32
    return %c0_i32, %c0_i32_0 : i32, i32
  }
  func.func @transform_2(%arg0: i32) -> (i32, i32) {
    %c0_i32 = arith.constant 0 : i32
    %c0_i32_0 = arith.constant 0 : i32
    %c0_i32_1 = arith.constant 0 : i32
    return %c0_i32, %c0_i32_0 : i32, i32
  }
  func.func @transform_3(%arg0: i32) -> (i32, i32) {
    %c0_i32 = arith.constant 0 : i32
    %c0_i32_0 = arith.constant 0 : i32
    %c0_i32_1 = arith.constant 0 : i32
    return %c0_i32, %c0_i32_0 : i32, i32
  }
  func.func @transform_4(%arg0: i32) -> (i32, i32) {
    %c0_i32 = arith.constant 0 : i32
    %c0_i32_0 = arith.constant 0 : i32
    %c0_i32_1 = arith.constant 0 : i32
    return %c0_i32, %c0_i32_0 : i32, i32
  }
  func.func @transform_5(%arg0: i32) -> (i32, i32) {
    %c0_i32 = arith.constant 0 : i32
    %c0_i32_0 = arith.constant 0 : i32
    %c0_i32_1 = arith.constant 0 : i32
    return %c0_i32, %c0_i32_0 : i32, i32
  }
  func.func @transform_6(%arg0: i32) -> (i32, i32) {
    %c0_i32 = arith.constant 0 : i32
    %c0_i32_0 = arith.constant 0 : i32
    %c0_i32_1 = arith.constant 0 : i32
    return %c0_i32, %c0_i32_0 : i32, i32
  }
  func.func @transform_7(%arg0: i32) -> (i32, i32) {
    %c0_i32 = arith.constant 0 : i32
    %c0_i32_0 = arith.constant 0 : i32
    %c0_i32_1 = arith.constant 0 : i32
    return %c0_i32, %c0_i32_0 : i32, i32
  }
  func.func @transform_8(%arg0: i32) -> (i32, i32) {
    %c0_i32 = arith.constant 0 : i32
    %c0_i32_0 = arith.constant 0 : i32
    %c0_i32_1 = arith.constant 0 : i32
    return %c0_i32, %c0_i32_0 : i32, i32
  }
  func.func @transform_9(%arg0: i32) -> (i32, i32, i32) {
    %c0_i32 = arith.constant 0 : i32
    %c0_i32_0 = arith.constant 0 : i32
    %c0_i32_1 = arith.constant 0 : i32
    return %arg0, %c0_i32, %c0_i32_0 : i32, i32, i32
  }
}

</mosaic_0001>

<llo_original>
// kernel: tpu_custom_call.1
$region0: #{tpu_custom_call.1}
  #allocation0 [shape = 'u32[]', space=smem, size = 0x4, offset = 0x4, fixed_abs, tag = 'smem constant byte address 0x4 - core index']
  #allocation1 [shape = 'u32[144,128]{1,0:T(1,128)}', space=vmem, size = 0x12000, scoped, tag = 'internal scratch']
  #allocation2 [shape = 'f32[1,1]{1,0:T(1,128)S(1)}', space=vmem, size = 0x200, scoped, tag = 'scoped memory for tpu_custom_call.1']
  %s0 = inlined_call_operand.vmem [shape: f32[512,3], index: 0, kind: input, shape index: {}]
  %s1 = inlined_call_operand.vmem [shape: f32[3,64], index: 1, kind: input, shape index: {}]
  %s2 = inlined_call_operand.vmem [shape: f32[1,64], index: 2, kind: input, shape index: {}]
  %s3 = inlined_call_operand.vmem [shape: bf16[64,128], index: 3, kind: input, shape index: {}]
  %s4 = inlined_call_operand.vmem [shape: f32[1,128], index: 4, kind: input, shape index: {}]
  %s5 = inlined_call_operand.vmem [shape: bf16[128,64], index: 5, kind: input, shape index: {}]
  %s6 = inlined_call_operand.vmem [shape: f32[1,64], index: 6, kind: input, shape index: {}]
  %s7 = inlined_call_operand.vmem [shape: f32[8,64], index: 7, kind: input, shape index: {}]
  %s8 = inlined_call_operand.<no memory space> [shape: f32[1,1], index: 8, kind: input, shape index: {}]
  %s9 = inlined_call_operand.hbm [shape: f32[2,1,256], index: 9, kind: output, shape index: {}]
  %s10 = sld [smem:[#allocation0]]
  $region69: #{tpu_custom_call.1} parent=0
    _
  %s12 = ssub.s32 1, %s10
  %s13 = scalar_select 0, %s12, %s10
  %v14 = vstv %s8
  %15 = vst [vmem:[#allocation2] sm:$0x1] %v14
  $region1: #{tpu_custom_call.1} parent=0
    #allocation3 [shape = 'u8[2048]{0}', space=vmem, size = 0x800, scoped, tag = 'output window, operand 0']
    #allocation4 [shape = 's32[2]{0}', space=sflag, size = 0x8, scoped, tag = 'scoped memory for tpu_custom_call.1']
    %16 = vsyncpa [#allocation4], 0
    %s17 = scalar_lea.sflag [#allocation4], 1
    %18 = vsyncpa %s17, 0
    loop: start=0, step=1, limit=4
    $region2: #{tpu_custom_call.1} parent=1 // loop_pre_header
      _
    $region3: #{tpu_custom_call.1} parent=1 // loop_header
      %s20 = sphi 0, %s24
      %p21 = scmp.ge.s32.totalorder %s20, 4
      %s30 = sphi 0, %s32
      %s33 = sphi 0, %s30
      %s34 = sphi 0, %s33
      %s50 = sphi 0, %s34
      %s54 = sphi 0, %s54
      %s56 = sphi 0, %s54
      %s57 = sphi 0, %s56
      %s71 = sphi 0, %s57
      %s75 = sphi 0, %s75
      %s77 = sphi 0, %s75
      %s78 = sphi 0, %s77
      %s92 = sphi 0, %s78
      %s96 = sphi 0, %s96
      %s98 = sphi 0, %s96
      %s99 = sphi 0, %s98
      %s113 = sphi 0, %s99
      %s117 = sphi 0, %s117
      %s119 = sphi 0, %s117
      %s120 = sphi 0, %s119
      %s134 = sphi 0, %s120
      %s138 = sphi 0, %s138
      %s140 = sphi 0, %s138
      %s141 = sphi 0, %s140
      %s155 = sphi 0, %s141
      %s159 = sphi 0, %s159
      %s161 = sphi 0, %s159
      %s162 = sphi 0, %s161
      %s176 = sphi 0, %s162
      %s180 = sphi 0, %s180
      %s182 = sphi 0, %s180
      %s183 = sphi 0, %s182
      %s197 = sphi 0, %s183
      %s201 = sphi 0, %s201
      %s203 = sphi 0, %s201
      %s204 = sphi 0, %s203
      %s218 = sphi 0, %s204
      %s224 = sphi 0, %s226
      %s227 = sphi 0, %s224
      %s228 = sphi 0, %s227
      %s244 = sphi 0, %s228
    $region4: #{tpu_custom_call.1} parent=1 // loop_header_branch
      %23 = sbr.rel (%p21) target = $region8
    $region5: #{tpu_custom_call.1} parent=1 // loop_body
      %s25 = ssub.s32 %s20, 1
      %s26 = ssub.s32 %s20, 2
      %s27 = sadd.s32 %s20, 1
      %s28 = ssub.s32 %s20, %s27
      %p29 = scmp.eq.s32.totalorder %s28, 0
      %s31 = sadd.s32 %s30, 1
      %s32 = scalar_select %p29, %s30, %s31
      %p35 = pneg %p29
      %p36 = scmp.eq.s32.totalorder %s20, 1
      %p37 = por %p35, %p36
      %p38 = scmp.ne.s32.totalorder %s30, %s33
      %p39 = scmp.eq.s32.totalorder %s20, 0
      %p40 = por %p38, %p39
      %p41 = scmp.ne.s32.totalorder %s30, %s33
      %p42 = scmp.eq.s32.totalorder %s25, 1
      %p43 = por %p41, %p42
      %p44 = scmp.ne.s32.totalorder %s33, %s34
      %p45 = scmp.eq.s32.totalorder %s25, 0
      %p46 = por %p44, %p45
      %p47 = scmp.ne.s32.totalorder %s33, %s34
      %p48 = scmp.eq.s32.totalorder %s26, 1
      %p49 = por %p47, %p48
      %p51 = scmp.ne.s32.totalorder %s34, %s50
      %p52 = scmp.eq.s32.totalorder %s26, 0
      %p53 = por %p51, %p52
      %s55 = sadd.s32 %s54, 1
      %p58 = scmp.eq.s32.totalorder %s20, 1
      %p59 = scmp.ne.s32.totalorder %s54, %s56
      %p60 = scmp.eq.s32.totalorder %s20, 0
      %p61 = por %p59, %p60
      %p62 = scmp.ne.s32.totalorder %s54, %s56
      %p63 = scmp.eq.s32.totalorder %s25, 1
      %p64 = por %p62, %p63
      %p65 = scmp.ne.s32.totalorder %s56, %s57
      %p66 = scmp.eq.s32.totalorder %s25, 0
      %p67 = por %p65, %p66
      %p68 = scmp.ne.s32.totalorder %s56, %s57
      %p69 = scmp.eq.s32.totalorder %s26, 1
      %p70 = por %p68, %p69
      %p72 = scmp.ne.s32.totalorder %s57, %s71
      %p73 = scmp.eq.s32.totalorder %s26, 0
      %p74 = por %p72, %p73
      %s76 = sadd.s32 %s75, 1
      %p79 = scmp.eq.s32.totalorder %s20, 1
      %p80 = scmp.ne.s32.totalorder %s75, %s77
      %p81 = scmp.eq.s32.totalorder %s20, 0
      %p82 = por %p80, %p81
      %p83 = scmp.ne.s32.totalorder %s75, %s77
      %p84 = scmp.eq.s32.totalorder %s25, 1
      %p85 = por %p83, %p84
      %p86 = scmp.ne.s32.totalorder %s77, %s78
      %p87 = scmp.eq.s32.totalorder %s25, 0
      %p88 = por %p86, %p87
      %p89 = scmp.ne.s32.totalorder %s77, %s78
      %p90 = scmp.eq.s32.totalorder %s26, 1
      %p91 = por %p89, %p90
      %p93 = scmp.ne.s32.totalorder %s78, %s92
      %p94 = scmp.eq.s32.totalorder %s26, 0
      %p95 = por %p93, %p94
      %s97 = sadd.s32 %s96, 1
      %p100 = scmp.eq.s32.totalorder %s20, 1
      %p101 = scmp.ne.s32.totalorder %s96, %s98
      %p102 = scmp.eq.s32.totalorder %s20, 0
      %p103 = por %p101, %p102
      %p104 = scmp.ne.s32.totalorder %s96, %s98
      %p105 = scmp.eq.s32.totalorder %s25, 1
      %p106 = por %p104, %p105
      %p107 = scmp.ne.s32.totalorder %s98, %s99
      %p108 = scmp.eq.s32.totalorder %s25, 0
      %p109 = por %p107, %p108
      %p110 = scmp.ne.s32.totalorder %s98, %s99
      %p111 = scmp.eq.s32.totalorder %s26, 1
      %p112 = por %p110, %p111
      %p114 = scmp.ne.s32.totalorder %s99, %s113
      %p115 = scmp.eq.s32.totalorder %s26, 0
      %p116 = por %p114, %p115
      %s118 = sadd.s32 %s117, 1
      %p121 = scmp.eq.s32.totalorder %s20, 1
      %p122 = scmp.ne.s32.totalorder %s117, %s119
      %p123 = scmp.eq.s32.totalorder %s20, 0
      %p124 = por %p122, %p123
      %p125 = scmp.ne.s32.totalorder %s117, %s119
      %p126 = scmp.eq.s32.totalorder %s25, 1
      %p127 = por %p125, %p126
      %p128 = scmp.ne.s32.totalorder %s119, %s120
      %p129 = scmp.eq.s32.totalorder %s25, 0
      %p130 = por %p128, %p129
      %p131 = scmp.ne.s32.totalorder %s119, %s120
      %p132 = scmp.eq.s32.totalorder %s26, 1
      %p133 = por %p131, %p132
      %p135 = scmp.ne.s32.totalorder %s120, %s134
      %p136 = scmp.eq.s32.totalorder %s26, 0
      %p137 = por %p135, %p136
      %s139 = sadd.s32 %s138, 1
      %p142 = scmp.eq.s32.totalorder %s20, 1
      %p143 = scmp.ne.s32.totalorder %s138, %s140
      %p144 = scmp.eq.s32.totalorder %s20, 0
      %p145 = por %p143, %p144
      %p146 = scmp.ne.s32.totalorder %s138, %s140
      %p147 = scmp.eq.s32.totalorder %s25, 1
      %p148 = por %p146, %p147
      %p149 = scmp.ne.s32.totalorder %s140, %s141
      %p150 = scmp.eq.s32.totalorder %s25, 0
      %p151 = por %p149, %p150
      %p152 = scmp.ne.s32.totalorder %s140, %s141
      %p153 = scmp.eq.s32.totalorder %s26, 1
      %p154 = por %p152, %p153
      %p156 = scmp.ne.s32.totalorder %s141, %s155
      %p157 = scmp.eq.s32.totalorder %s26, 0
      %p158 = por %p156, %p157
      %s160 = sadd.s32 %s159, 1
      %p163 = scmp.eq.s32.totalorder %s20, 1
      %p164 = scmp.ne.s32.totalorder %s159, %s161
      %p165 = scmp.eq.s32.totalorder %s20, 0
      %p166 = por %p164, %p165
      %p167 = scmp.ne.s32.totalorder %s159, %s161
      %p168 = scmp.eq.s32.totalorder %s25, 1
      %p169 = por %p167, %p168
      %p170 = scmp.ne.s32.totalorder %s161, %s162
      %p171 = scmp.eq.s32.totalorder %s25, 0
      %p172 = por %p170, %p171
      %p173 = scmp.ne.s32.totalorder %s161, %s162
      %p174 = scmp.eq.s32.totalorder %s26, 1
      %p175 = por %p173, %p174
      %p177 = scmp.ne.s32.totalorder %s162, %s176
      %p178 = scmp.eq.s32.totalorder %s26, 0
      %p179 = por %p177, %p178
      %s181 = sadd.s32 %s180, 1
      %p184 = scmp.eq.s32.totalorder %s20, 1
      %p185 = scmp.ne.s32.totalorder %s180, %s182
      %p186 = scmp.eq.s32.totalorder %s20, 0
      %p187 = por %p185, %p186
      %p188 = scmp.ne.s32.totalorder %s180, %s182
      %p189 = scmp.eq.s32.totalorder %s25, 1
      %p190 = por %p188, %p189
      %p191 = scmp.ne.s32.totalorder %s182, %s183
      %p192 = scmp.eq.s32.totalorder %s25, 0
      %p193 = por %p191, %p192
      %p194 = scmp.ne.s32.totalorder %s182, %s183
      %p195 = scmp.eq.s32.totalorder %s26, 1
      %p196 = por %p194, %p195
      %p198 = scmp.ne.s32.totalorder %s183, %s197
      %p199 = scmp.eq.s32.totalorder %s26, 0
      %p200 = por %p198, %p199
      %s202 = sadd.s32 %s201, 1
      %p205 = scmp.eq.s32.totalorder %s20, 1
      %p206 = scmp.ne.s32.totalorder %s201, %s203
      %p207 = scmp.eq.s32.totalorder %s20, 0
      %p208 = por %p206, %p207
      %p209 = scmp.ne.s32.totalorder %s201, %s203
      %p210 = scmp.eq.s32.totalorder %s25, 1
      %p211 = por %p209, %p210
      %p212 = scmp.ne.s32.totalorder %s203, %s204
      %p213 = scmp.eq.s32.totalorder %s25, 0
      %p214 = por %p212, %p213
      %p215 = scmp.ne.s32.totalorder %s203, %s204
      %p216 = scmp.eq.s32.totalorder %s26, 1
      %p217 = por %p215, %p216
      %p219 = scmp.ne.s32.totalorder %s204, %s218
      %p220 = scmp.eq.s32.totalorder %s26, 0
      %p221 = por %p219, %p220
      %s222 = ssub.s32 %s20, %s27
      %p223 = scmp.eq.s32.totalorder %s222, 0
      %s225 = sadd.s32 %s224, 1
      %s226 = scalar_select %p223, %s224, %s225
      %p229 = pneg %p223
      %p230 = scmp.eq.s32.totalorder %s20, 1
      %p231 = por %p229, %p230
      %p232 = scmp.ne.s32.totalorder %s224, %s227
      %p233 = scmp.eq.s32.totalorder %s20, 0
      %p234 = por %p232, %p233
      %p235 = scmp.ne.s32.totalorder %s224, %s227
      %p236 = scmp.eq.s32.totalorder %s25, 1
      %p237 = por %p235, %p236
      %p238 = scmp.ne.s32.totalorder %s227, %s228
      %p239 = scmp.eq.s32.totalorder %s25, 0
      %p240 = por %p238, %p239
      %p241 = scmp.ne.s32.totalorder %s227, %s228
      %p242 = scmp.eq.s32.totalorder %s26, 1
      %p243 = por %p241, %p242
      %p245 = scmp.ne.s32.totalorder %s228, %s244
      %p246 = scmp.eq.s32.totalorder %s26, 0
      %p247 = por %p245, %p246
      %p248 = scmp.le.s32.totalorder 1, %s20
      %p249 = scmp.lt.s32.totalorder %s20, 3
      %p250 = pnand %p248, %p249
      %p251 = pneg %p250
      // Predicated region
      $region9: #{tpu_custom_call.1} parent=5 // pred_check
        _
      $region10: #{tpu_custom_call.1} parent=5 // pred_check_branch
        %253 = sbr.rel (%p250) target = $region12
      $region11: #{tpu_custom_call.1} parent=5 // pred_region
        %s254 = ssub.s32 %s20, 1
        // Predicated region
        $region13: #{tpu_custom_call.1} parent=11 // pred_check
          %p255 = pneg %p67
        $region14: #{tpu_custom_call.1} parent=11 // pred_check_branch
          %257 = sbr.rel (%p255) target = $region16
        $region15: #{tpu_custom_call.1} parent=11 // pred_region
          _
        $region16: #{tpu_custom_call.1} parent=11 // pred_fallthru
          _
        // Predicated region
        $region17: #{tpu_custom_call.1} parent=11 // pred_check
          %p258 = pneg %p88
        $region18: #{tpu_custom_call.1} parent=11 // pred_check_branch
          %260 = sbr.rel (%p258) target = $region20
        $region19: #{tpu_custom_call.1} parent=11 // pred_region
          _
        $region20: #{tpu_custom_call.1} parent=11 // pred_fallthru
          _
        // Predicated region
        $region21: #{tpu_custom_call.1} parent=11 // pred_check
          %p261 = pneg %p109
        $region22: #{tpu_custom_call.1} parent=11 // pred_check_branch
          %263 = sbr.rel (%p261) target = $region24
        $region23: #{tpu_custom_call.1} parent=11 // pred_region
          _
        $region24: #{tpu_custom_call.1} parent=11 // pred_fallthru
          _
        // Predicated region
        $region25: #{tpu_custom_call.1} parent=11 // pred_check
          %p264 = pneg %p130
        $region26: #{tpu_custom_call.1} parent=11 // pred_check_branch
          %266 = sbr.rel (%p264) target = $region28
        $region27: #{tpu_custom_call.1} parent=11 // pred_region
          _
        $region28: #{tpu_custom_call.1} parent=11 // pred_fallthru
          _
        // Predicated region
        $region29: #{tpu_custom_call.1} parent=11 // pred_check
          %p267 = pneg %p151
        $region30: #{tpu_custom_call.1} parent=11 // pred_check_branch
          %269 = sbr.rel (%p267) target = $region32
        $region31: #{tpu_custom_call.1} parent=11 // pred_region
          _
        $region32: #{tpu_custom_call.1} parent=11 // pred_fallthru
          _
        // Predicated region
        $region33: #{tpu_custom_call.1} parent=11 // pred_check
          %p270 = pneg %p172
        $region34: #{tpu_custom_call.1} parent=11 // pred_check_branch
          %272 = sbr.rel (%p270) target = $region36
        $region35: #{tpu_custom_call.1} parent=11 // pred_region
          _
        $region36: #{tpu_custom_call.1} parent=11 // pred_fallthru
          _
        // Predicated region
        $region37: #{tpu_custom_call.1} parent=11 // pred_check
          %p273 = pneg %p193
        $region38: #{tpu_custom_call.1} parent=11 // pred_check_branch
          %275 = sbr.rel (%p273) target = $region40
        $region39: #{tpu_custom_call.1} parent=11 // pred_region
          _
        $region40: #{tpu_custom_call.1} parent=11 // pred_fallthru
          _
        // Predicated region
        $region41: #{tpu_custom_call.1} parent=11 // pred_check
          %p276 = pneg %p214
        $region42: #{tpu_custom_call.1} parent=11 // pred_check_branch
          %278 = sbr.rel (%p276) target = $region44
        $region43: #{tpu_custom_call.1} parent=11 // pred_region
          _
        $region44: #{tpu_custom_call.1} parent=11 // pred_fallthru
          _
      $region12: #{tpu_custom_call.1} parent=5 // pred_fallthru
        _
      %p279 = scmp.lt.s32.totalorder %s20, 2
      // Predicated region
      $region45: #{tpu_custom_call.1} parent=5 // pred_check
        %p280 = pneg %p279
      $region46: #{tpu_custom_call.1} parent=5 // pred_check_branch
        %282 = sbr.rel (%p280) target = $region48
      $region47: #{tpu_custom_call.1} parent=5 // pred_region
        // Predicated region
        $region49: #{tpu_custom_call.1} parent=47 // pred_check
          %p283 = pneg %p40
        $region50: #{tpu_custom_call.1} parent=47 // pred_check_branch
          %285 = sbr.rel (%p283) target = $region52
        $region51: #{tpu_custom_call.1} parent=47 // pred_region
          %s286 = smul.u32 32, %s20
          %p287 = scmp.lt.s32.totalorder %s286, 63
          %s288 = scalar_select %p287, %s286, 63
          %s289 = smul.addr %s288, 8
          %s290 = scalar_lea.vmem %s0, %s289
          %s291 = smul.u32 32, %s20
        $region52: #{tpu_custom_call.1} parent=47 // pred_fallthru
          _
      $region48: #{tpu_custom_call.1} parent=5 // pred_fallthru
        _
      %p292 = scmp.le.s32.totalorder 1, %s20
      %p293 = scmp.lt.s32.totalorder %s20, 3
      %p294 = pnand %p292, %p293
      %p295 = pneg %p294
      // Predicated region
      $region53: #{tpu_custom_call.1} parent=5 // pred_check
        _
      $region54: #{tpu_custom_call.1} parent=5 // pred_check_branch
        %297 = sbr.rel (%p294) target = $region56
      $region55: #{tpu_custom_call.1} parent=5 // pred_region
        %s298 = ssub.s32 %s20, 1
        %s299 = smul.u32 32, %s25
        %p300 = scmp.lt.s32.totalorder %s299, 63
        %s301 = scalar_select %p300, %s299, 63
        %s302 = smul.addr %s301, 8
        %s303 = scalar_lea.vmem %s0, %s302
        %p304 = pneg %p46
        %p305 = pneg %p43
        %p306 = pneg %p67
        %p307 = pneg %p64
        %p308 = pneg %p88
        %p309 = pneg %p85
        %p310 = pneg %p109
        %p311 = pneg %p106
        %p312 = pneg %p130
        %p313 = pneg %p127
        %p314 = pneg %p151
        %p315 = pneg %p148
        %p316 = pneg %p172
        %p317 = pneg %p169
        %p318 = pneg %p193
        %p319 = pneg %p190
        %p320 = pneg %p214
        %p321 = pneg %p211
        %p322 = pneg %p240
        %p323 = pneg %p237
        %s324 = sand.u32 %s227, 1
        %s325 = scalar_lea.sflag [#allocation4], %s324
        %s326 = sand.u32 %s227, 1
        %s327 = smul.addr %s326, 2
        %s328 = scalar_lea.vmem [#allocation3], %s327
        %s329 = smul.u32 32, %s25
        %p330 = scmp.lt.s32.totalorder %s329, 63
        %s331 = scalar_select %p330, %s329, 63
        %s332 = smul.addr %s331, 8
        %s333 = scalar_lea.vmem %s0, %s332
        %s334 = smul.u32 32, %s25
        %v336 = vld [vmem:[%s333] sm:$0xff]
        %v337 = vld [vmem:[%s333 + $0x8] sm:$0xff]
        %v338 = vld [vmem:[%s333 + $0x10] sm:$0xff]
        %v339 = vld [vmem:[%s333 + $0x18] sm:$0xff]
        %v340 = vld [vmem:[%s333 + $0x20] sm:$0xff]
        %v341 = vld [vmem:[%s333 + $0x28] sm:$0xff]
        %v342 = vld [vmem:[%s333 + $0x30] sm:$0xff]
        %v343 = vld [vmem:[%s333 + $0x38] sm:$0xff]
        %v344 = vld [vmem:[%s333 + $0x40] sm:$0xff]
        %v345 = vld [vmem:[%s333 + $0x48] sm:$0xff]
        %v346 = vld [vmem:[%s333 + $0x50] sm:$0xff]
        %v347 = vld [vmem:[%s333 + $0x58] sm:$0xff]
        %v348 = vld [vmem:[%s333 + $0x60] sm:$0xff]
        %v349 = vld [vmem:[%s333 + $0x68] sm:$0xff]
        %v350 = vld [vmem:[%s333 + $0x70] sm:$0xff]
        %v351 = vld [vmem:[%s333 + $0x78] sm:$0xff]
        %v352 = vld [vmem:[%s333 + $0x80] sm:$0xff]
        %v353 = vld [vmem:[%s333 + $0x88] sm:$0xff]
        %v354 = vld [vmem:[%s333 + $0x90] sm:$0xff]
        %v355 = vld [vmem:[%s333 + $0x98] sm:$0xff]
        %v356 = vld [vmem:[%s333 + $0xa0] sm:$0xff]
        %v357 = vld [vmem:[%s333 + $0xa8] sm:$0xff]
        %v358 = vld [vmem:[%s333 + $0xb0] sm:$0xff]
        %v359 = vld [vmem:[%s333 + $0xb8] sm:$0xff]
        %v360 = vld [vmem:[%s333 + $0xc0] sm:$0xff]
        %v361 = vld [vmem:[%s333 + $0xc8] sm:$0xff]
        %v362 = vld [vmem:[%s333 + $0xd0] sm:$0xff]
        %v363 = vld [vmem:[%s333 + $0xd8] sm:$0xff]
        %v364 = vld [vmem:[%s333 + $0xe0] sm:$0xff]
        %v365 = vld [vmem:[%s333 + $0xe8] sm:$0xff]
        %v366 = vld [vmem:[%s333 + $0xf0] sm:$0xff]
        %v367 = vld [vmem:[%s333 + $0xf8] sm:$0xff]
        %v368 = vld [vmem:[%s1] sm:$0x7]
        %370 = vset.pattern.permute.xlu0 0
        %371 = vperm.xlu0 %370, %v336
        %v372 = vpop.permute.xlu0 %371
        %375 = vset.pattern.permute.xlu0 0
        %376 = vperm.xlu0 %375, %v337
        %v377 = vpop.permute.xlu0 %376
        %380 = vset.pattern.permute.xlu0 0
        %381 = vperm.xlu0 %380, %v338
        %v382 = vpop.permute.xlu0 %381
        %385 = vset.pattern.permute.xlu0 0
        %386 = vperm.xlu0 %385, %v339
        %v387 = vpop.permute.xlu0 %386
        %390 = vset.pattern.permute.xlu0 0
        %391 = vperm.xlu0 %390, %v340
        %v392 = vpop.permute.xlu0 %391
        %395 = vset.pattern.permute.xlu0 0
        %396 = vperm.xlu0 %395, %v341
        %v397 = vpop.permute.xlu0 %396
        %400 = vset.pattern.permute.xlu0 0
        %401 = vperm.xlu0 %400, %v342
        %v402 = vpop.permute.xlu0 %401
        %405 = vset.pattern.permute.xlu0 0
        %406 = vperm.xlu0 %405, %v343
        %v407 = vpop.permute.xlu0 %406
        %410 = vset.pattern.permute.xlu0 0
        %411 = vperm.xlu0 %410, %v344
        %v412 = vpop.permute.xlu0 %411
        %415 = vset.pattern.permute.xlu0 0
        %416 = vperm.xlu0 %415, %v345
        %v417 = vpop.permute.xlu0 %416
        %420 = vset.pattern.permute.xlu0 0
        %421 = vperm.xlu0 %420, %v346
        %v422 = vpop.permute.xlu0 %421
        %425 = vset.pattern.permute.xlu0 0
        %426 = vperm.xlu0 %425, %v347
        %v427 = vpop.permute.xlu0 %426
        %430 = vset.pattern.permute.xlu0 0
        %431 = vperm.xlu0 %430, %v348
        %v432 = vpop.permute.xlu0 %431
        %435 = vset.pattern.permute.xlu0 0
        %436 = vperm.xlu0 %435, %v349
        %v437 = vpop.permute.xlu0 %436
        %440 = vset.pattern.permute.xlu0 0
        %441 = vperm.xlu0 %440, %v350
        %v442 = vpop.permute.xlu0 %441
        %445 = vset.pattern.permute.xlu0 0
        %446 = vperm.xlu0 %445, %v351
        %v447 = vpop.permute.xlu0 %446
        %450 = vset.pattern.permute.xlu0 0
        %451 = vperm.xlu0 %450, %v352
        %v452 = vpop.permute.xlu0 %451
        %455 = vset.pattern.permute.xlu0 0
        %456 = vperm.xlu0 %455, %v353
        %v457 = vpop.permute.xlu0 %456
        %460 = vset.pattern.permute.xlu0 0
        %461 = vperm.xlu0 %460, %v354
        %v462 = vpop.permute.xlu0 %461
        %465 = vset.pattern.permute.xlu0 0
        %466 = vperm.xlu0 %465, %v355
        %v467 = vpop.permute.xlu0 %466
        %470 = vset.pattern.permute.xlu0 0
        %471 = vperm.xlu0 %470, %v356
        %v472 = vpop.permute.xlu0 %471
        %475 = vset.pattern.permute.xlu0 0
        %476 = vperm.xlu0 %475, %v357
        %v477 = vpop.permute.xlu0 %476
        %480 = vset.pattern.permute.xlu0 0
        %481 = vperm.xlu0 %480, %v358
        %v482 = vpop.permute.xlu0 %481
        %485 = vset.pattern.permute.xlu0 0
        %486 = vperm.xlu0 %485, %v359
        %v487 = vpop.permute.xlu0 %486
        %490 = vset.pattern.permute.xlu0 0
        %491 = vperm.xlu0 %490, %v360
        %v492 = vpop.permute.xlu0 %491
        %495 = vset.pattern.permute.xlu0 0
        %496 = vperm.xlu0 %495, %v361
        %v497 = vpop.permute.xlu0 %496
        %500 = vset.pattern.permute.xlu0 0
        %501 = vperm.xlu0 %500, %v362
        %v502 = vpop.permute.xlu0 %501
        %505 = vset.pattern.permute.xlu0 0
        %506 = vperm.xlu0 %505, %v363
        %v507 = vpop.permute.xlu0 %506
        %510 = vset.pattern.permute.xlu0 0
        %511 = vperm.xlu0 %510, %v364
        %v512 = vpop.permute.xlu0 %511
        %515 = vset.pattern.permute.xlu0 0
        %516 = vperm.xlu0 %515, %v365
        %v517 = vpop.permute.xlu0 %516
        %520 = vset.pattern.permute.xlu0 0
        %521 = vperm.xlu0 %520, %v366
        %v522 = vpop.permute.xlu0 %521
        %525 = vset.pattern.permute.xlu0 0
        %526 = vperm.xlu0 %525, %v367
        %v527 = vpop.permute.xlu0 %526
        %v529 = vlaneseq
        %v530 = vshrl.u32 %v529, 7
        %v531 = vsub.s32 0, %v530
        %v532 = vrot.slane %v368, %v531
        %v533 = vmul.f32 %v372, %v532
        %v534 = vmul.f32 %v377, %v532
        %v535 = vmul.f32 %v382, %v532
        %v536 = vmul.f32 %v387, %v532
        %v537 = vmul.f32 %v392, %v532
        %v538 = vmul.f32 %v397, %v532
        %v539 = vmul.f32 %v402, %v532
        %v540 = vmul.f32 %v407, %v532
        %v541 = vmul.f32 %v412, %v532
        %v542 = vmul.f32 %v417, %v532
        %v543 = vmul.f32 %v422, %v532
        %v544 = vmul.f32 %v427, %v532
        %v545 = vmul.f32 %v432, %v532
        %v546 = vmul.f32 %v437, %v532
        %v547 = vmul.f32 %v442, %v532
        %v548 = vmul.f32 %v447, %v532
        %v549 = vmul.f32 %v452, %v532
        %v550 = vmul.f32 %v457, %v532
        %v551 = vmul.f32 %v462, %v532
        %v552 = vmul.f32 %v467, %v532
        %v553 = vmul.f32 %v472, %v532
        %v554 = vmul.f32 %v477, %v532
        %v555 = vmul.f32 %v482, %v532
        %v556 = vmul.f32 %v487, %v532
        %v557 = vmul.f32 %v492, %v532
        %v558 = vmul.f32 %v497, %v532
        %v559 = vmul.f32 %v502, %v532
        %v560 = vmul.f32 %v507, %v532
        %v561 = vmul.f32 %v512, %v532
        %v562 = vmul.f32 %v517, %v532
        %v563 = vmul.f32 %v522, %v532
        %v564 = vmul.f32 %v527, %v532
        %565 = vset.pattern.permute.xlu0 1
        %566 = vperm.xlu0 %565, %v336
        %v567 = vpop.permute.xlu0 %566
        %569 = vset.pattern.permute.xlu0 1
        %570 = vperm.xlu0 %569, %v337
        %v571 = vpop.permute.xlu0 %570
        %573 = vset.pattern.permute.xlu0 1
        %574 = vperm.xlu0 %573, %v338
        %v575 = vpop.permute.xlu0 %574
        %577 = vset.pattern.permute.xlu0 1
        %578 = vperm.xlu0 %577, %v339
        %v579 = vpop.permute.xlu0 %578
        %581 = vset.pattern.permute.xlu0 1
        %582 = vperm.xlu0 %581, %v340
        %v583 = vpop.permute.xlu0 %582
        %585 = vset.pattern.permute.xlu0 1
        %586 = vperm.xlu0 %585, %v341
        %v587 = vpop.permute.xlu0 %586
        %589 = vset.pattern.permute.xlu0 1
        %590 = vperm.xlu0 %589, %v342
        %v591 = vpop.permute.xlu0 %590
        %593 = vset.pattern.permute.xlu0 1
        %594 = vperm.xlu0 %593, %v343
        %v595 = vpop.permute.xlu0 %594
        %597 = vset.pattern.permute.xlu0 1
        %598 = vperm.xlu0 %597, %v344
        %v599 = vpop.permute.xlu0 %598
        %601 = vset.pattern.permute.xlu0 1
        %602 = vperm.xlu0 %601, %v345
        %v603 = vpop.permute.xlu0 %602
        %605 = vset.pattern.permute.xlu0 1
        %606 = vperm.xlu0 %605, %v346
        %v607 = vpop.permute.xlu0 %606
        %609 = vset.pattern.permute.xlu0 1
        %610 = vperm.xlu0 %609, %v347
        %v611 = vpop.permute.xlu0 %610
        %613 = vset.pattern.permute.xlu0 1
        %614 = vperm.xlu0 %613, %v348
        %v615 = vpop.permute.xlu0 %614
        %617 = vset.pattern.permute.xlu0 1
        %618 = vperm.xlu0 %617, %v349
        %v619 = vpop.permute.xlu0 %618
        %621 = vset.pattern.permute.xlu0 1
        %622 = vperm.xlu0 %621, %v350
        %v623 = vpop.permute.xlu0 %622
        %625 = vset.pattern.permute.xlu0 1
        %626 = vperm.xlu0 %625, %v351
        %v627 = vpop.permute.xlu0 %626
        %629 = vset.pattern.permute.xlu0 1
        %630 = vperm.xlu0 %629, %v352
        %v631 = vpop.permute.xlu0 %630
        %633 = vset.pattern.permute.xlu0 1
        %634 = vperm.xlu0 %633, %v353
        %v635 = vpop.permute.xlu0 %634
        %637 = vset.pattern.permute.xlu0 1
        %638 = vperm.xlu0 %637, %v354
        %v639 = vpop.permute.xlu0 %638
        %641 = vset.pattern.permute.xlu0 1
        %642 = vperm.xlu0 %641, %v355
        %v643 = vpop.permute.xlu0 %642
        %645 = vset.pattern.permute.xlu0 1
        %646 = vperm.xlu0 %645, %v356
        %v647 = vpop.permute.xlu0 %646
        %649 = vset.pattern.permute.xlu0 1
        %650 = vperm.xlu0 %649, %v357
        %v651 = vpop.permute.xlu0 %650
        %653 = vset.pattern.permute.xlu0 1
        %654 = vperm.xlu0 %653, %v358
        %v655 = vpop.permute.xlu0 %654
        %657 = vset.pattern.permute.xlu0 1
        %658 = vperm.xlu0 %657, %v359
        %v659 = vpop.permute.xlu0 %658
        %661 = vset.pattern.permute.xlu0 1
        %662 = vperm.xlu0 %661, %v360
        %v663 = vpop.permute.xlu0 %662
        %665 = vset.pattern.permute.xlu0 1
        %666 = vperm.xlu0 %665, %v361
        %v667 = vpop.permute.xlu0 %666
        %669 = vset.pattern.permute.xlu0 1
        %670 = vperm.xlu0 %669, %v362
        %v671 = vpop.permute.xlu0 %670
        %673 = vset.pattern.permute.xlu0 1
        %674 = vperm.xlu0 %673, %v363
        %v675 = vpop.permute.xlu0 %674
        %677 = vset.pattern.permute.xlu0 1
        %678 = vperm.xlu0 %677, %v364
        %v679 = vpop.permute.xlu0 %678
        %681 = vset.pattern.permute.xlu0 1
        %682 = vperm.xlu0 %681, %v365
        %v683 = vpop.permute.xlu0 %682
        %685 = vset.pattern.permute.xlu0 1
        %686 = vperm.xlu0 %685, %v366
        %v687 = vpop.permute.xlu0 %686
        %689 = vset.pattern.permute.xlu0 1
        %690 = vperm.xlu0 %689, %v367
        %v691 = vpop.permute.xlu0 %690
        %v693 = vlaneseq
        %v694 = vshrl.u32 %v693, 7
        %v695 = vsub.s32 1, %v694
        %v696 = vrot.slane %v368, %v695
        %v697 = vmul.f32 %v567, %v696
        %v698 = vmul.f32 %v571, %v696
        %v699 = vmul.f32 %v575, %v696
        %v700 = vmul.f32 %v579, %v696
        %v701 = vmul.f32 %v583, %v696
        %v702 = vmul.f32 %v587, %v696
        %v703 = vmul.f32 %v591, %v696
        %v704 = vmul.f32 %v595, %v696
        %v705 = vmul.f32 %v599, %v696
        %v706 = vmul.f32 %v603, %v696
        %v707 = vmul.f32 %v607, %v696
        %v708 = vmul.f32 %v611, %v696
        %v709 = vmul.f32 %v615, %v696
        %v710 = vmul.f32 %v619, %v696
        %v711 = vmul.f32 %v623, %v696
        %v712 = vmul.f32 %v627, %v696
        %v713 = vmul.f32 %v631, %v696
        %v714 = vmul.f32 %v635, %v696
        %v715 = vmul.f32 %v639, %v696
        %v716 = vmul.f32 %v643, %v696
        %v717 = vmul.f32 %v647, %v696
        %v718 = vmul.f32 %v651, %v696
        %v719 = vmul.f32 %v655, %v696
        %v720 = vmul.f32 %v659, %v696
        %v721 = vmul.f32 %v663, %v696
        %v722 = vmul.f32 %v667, %v696
        %v723 = vmul.f32 %v671, %v696
        %v724 = vmul.f32 %v675, %v696
        %v725 = vmul.f32 %v679, %v696
        %v726 = vmul.f32 %v683, %v696
        %v727 = vmul.f32 %v687, %v696
        %v728 = vmul.f32 %v691, %v696
        %v729 = vadd.f32 %v533, %v697
        %v730 = vadd.f32 %v534, %v698
        %v731 = vadd.f32 %v535, %v699
        %v732 = vadd.f32 %v536, %v700
        %v733 = vadd.f32 %v537, %v701
        %v734 = vadd.f32 %v538, %v702
        %v735 = vadd.f32 %v539, %v703
        %v736 = vadd.f32 %v540, %v704
        %v737 = vadd.f32 %v541, %v705
        %v738 = vadd.f32 %v542, %v706
        %v739 = vadd.f32 %v543, %v707
        %v740 = vadd.f32 %v544, %v708
        %v741 = vadd.f32 %v545, %v709
        %v742 = vadd.f32 %v546, %v710
        %v743 = vadd.f32 %v547, %v711
        %v744 = vadd.f32 %v548, %v712
        %v745 = vadd.f32 %v549, %v713
        %v746 = vadd.f32 %v550, %v714
        %v747 = vadd.f32 %v551, %v715
        %v748 = vadd.f32 %v552, %v716
        %v749 = vadd.f32 %v553, %v717
        %v750 = vadd.f32 %v554, %v718
        %v751 = vadd.f32 %v555, %v719
        %v752 = vadd.f32 %v556, %v720
        %v753 = vadd.f32 %v557, %v721
        %v754 = vadd.f32 %v558, %v722
        %v755 = vadd.f32 %v559, %v723
        %v756 = vadd.f32 %v560, %v724
        %v757 = vadd.f32 %v561, %v725
        %v758 = vadd.f32 %v562, %v726
        %v759 = vadd.f32 %v563, %v727
        %v760 = vadd.f32 %v564, %v728
        %761 = vset.pattern.permute.xlu0 2
        %762 = vperm.xlu0 %761, %v336
        %v763 = vpop.permute.xlu0 %762
        %765 = vset.pattern.permute.xlu0 2
        %766 = vperm.xlu0 %765, %v337
        %v767 = vpop.permute.xlu0 %766
        %769 = vset.pattern.permute.xlu0 2
        %770 = vperm.xlu0 %769, %v338
        %v771 = vpop.permute.xlu0 %770
        %773 = vset.pattern.permute.xlu0 2
        %774 = vperm.xlu0 %773, %v339
        %v775 = vpop.permute.xlu0 %774
        %777 = vset.pattern.permute.xlu0 2
        %778 = vperm.xlu0 %777, %v340
        %v779 = vpop.permute.xlu0 %778
        %781 = vset.pattern.permute.xlu0 2
        %782 = vperm.xlu0 %781, %v341
        %v783 = vpop.permute.xlu0 %782
        %785 = vset.pattern.permute.xlu0 2
        %786 = vperm.xlu0 %785, %v342
        %v787 = vpop.permute.xlu0 %786
        %789 = vset.pattern.permute.xlu0 2
        %790 = vperm.xlu0 %789, %v343
        %v791 = vpop.permute.xlu0 %790
        %793 = vset.pattern.permute.xlu0 2
        %794 = vperm.xlu0 %793, %v344
        %v795 = vpop.permute.xlu0 %794
        %797 = vset.pattern.permute.xlu0 2
        %798 = vperm.xlu0 %797, %v345
        %v799 = vpop.permute.xlu0 %798
        %801 = vset.pattern.permute.xlu0 2
        %802 = vperm.xlu0 %801, %v346
        %v803 = vpop.permute.xlu0 %802
        %805 = vset.pattern.permute.xlu0 2
        %806 = vperm.xlu0 %805, %v347
        %v807 = vpop.permute.xlu0 %806
        %809 = vset.pattern.permute.xlu0 2
        %810 = vperm.xlu0 %809, %v348
        %v811 = vpop.permute.xlu0 %810
        %813 = vset.pattern.permute.xlu0 2
        %814 = vperm.xlu0 %813, %v349
        %v815 = vpop.permute.xlu0 %814
        %817 = vset.pattern.permute.xlu0 2
        %818 = vperm.xlu0 %817, %v350
        %v819 = vpop.permute.xlu0 %818
        %821 = vset.pattern.permute.xlu0 2
        %822 = vperm.xlu0 %821, %v351
        %v823 = vpop.permute.xlu0 %822
        %825 = vset.pattern.permute.xlu0 2
        %826 = vperm.xlu0 %825, %v352
        %v827 = vpop.permute.xlu0 %826
        %829 = vset.pattern.permute.xlu0 2
        %830 = vperm.xlu0 %829, %v353
        %v831 = vpop.permute.xlu0 %830
        %833 = vset.pattern.permute.xlu0 2
        %834 = vperm.xlu0 %833, %v354
        %v835 = vpop.permute.xlu0 %834
        %837 = vset.pattern.permute.xlu0 2
        %838 = vperm.xlu0 %837, %v355
        %v839 = vpop.permute.xlu0 %838
        %841 = vset.pattern.permute.xlu0 2
        %842 = vperm.xlu0 %841, %v356
        %v843 = vpop.permute.xlu0 %842
        %845 = vset.pattern.permute.xlu0 2
        %846 = vperm.xlu0 %845, %v357
        %v847 = vpop.permute.xlu0 %846
        %849 = vset.pattern.permute.xlu0 2
        %850 = vperm.xlu0 %849, %v358
        %v851 = vpop.permute.xlu0 %850
        %853 = vset.pattern.permute.xlu0 2
        %854 = vperm.xlu0 %853, %v359
        %v855 = vpop.permute.xlu0 %854
        %857 = vset.pattern.permute.xlu0 2
        %858 = vperm.xlu0 %857, %v360
        %v859 = vpop.permute.xlu0 %858
        %861 = vset.pattern.permute.xlu0 2
        %862 = vperm.xlu0 %861, %v361
        %v863 = vpop.permute.xlu0 %862
        %865 = vset.pattern.permute.xlu0 2
        %866 = vperm.xlu0 %865, %v362
        %v867 = vpop.permute.xlu0 %866
        %869 = vset.pattern.permute.xlu0 2
        %870 = vperm.xlu0 %869, %v363
        %v871 = vpop.permute.xlu0 %870
        %873 = vset.pattern.permute.xlu0 2
        %874 = vperm.xlu0 %873, %v364
        %v875 = vpop.permute.xlu0 %874
        %877 = vset.pattern.permute.xlu0 2
        %878 = vperm.xlu0 %877, %v365
        %v879 = vpop.permute.xlu0 %878
        %881 = vset.pattern.permute.xlu0 2
        %882 = vperm.xlu0 %881, %v366
        %v883 = vpop.permute.xlu0 %882
        %885 = vset.pattern.permute.xlu0 2
        %886 = vperm.xlu0 %885, %v367
        %v887 = vpop.permute.xlu0 %886
        %v889 = vlaneseq
        %v890 = vshrl.u32 %v889, 7
        %v891 = vsub.s32 2, %v890
        %v892 = vrot.slane %v368, %v891
        %v893 = vmul.f32 %v763, %v892
        %v894 = vmul.f32 %v767, %v892
        %v895 = vmul.f32 %v771, %v892
        %v896 = vmul.f32 %v775, %v892
        %v897 = vmul.f32 %v779, %v892
        %v898 = vmul.f32 %v783, %v892
        %v899 = vmul.f32 %v787, %v892
        %v900 = vmul.f32 %v791, %v892
        %v901 = vmul.f32 %v795, %v892
        %v902 = vmul.f32 %v799, %v892
        %v903 = vmul.f32 %v803, %v892
        %v904 = vmul.f32 %v807, %v892
        %v905 = vmul.f32 %v811, %v892
        %v906 = vmul.f32 %v815, %v892
        %v907 = vmul.f32 %v819, %v892
        %v908 = vmul.f32 %v823, %v892
        %v909 = vmul.f32 %v827, %v892
        %v910 = vmul.f32 %v831, %v892
        %v911 = vmul.f32 %v835, %v892
        %v912 = vmul.f32 %v839, %v892
        %v913 = vmul.f32 %v843, %v892
        %v914 = vmul.f32 %v847, %v892
        %v915 = vmul.f32 %v851, %v892
        %v916 = vmul.f32 %v855, %v892
        %v917 = vmul.f32 %v859, %v892
        %v918 = vmul.f32 %v863, %v892
        %v919 = vmul.f32 %v867, %v892
        %v920 = vmul.f32 %v871, %v892
        %v921 = vmul.f32 %v875, %v892
        %v922 = vmul.f32 %v879, %v892
        %v923 = vmul.f32 %v883, %v892
        %v924 = vmul.f32 %v887, %v892
        %v925 = vadd.f32 %v729, %v893
        %v926 = vadd.f32 %v730, %v894
        %v927 = vadd.f32 %v731, %v895
        %v928 = vadd.f32 %v732, %v896
        %v929 = vadd.f32 %v733, %v897
        %v930 = vadd.f32 %v734, %v898
        %v931 = vadd.f32 %v735, %v899
        %v932 = vadd.f32 %v736, %v900
        %v933 = vadd.f32 %v737, %v901
        %v934 = vadd.f32 %v738, %v902
        %v935 = vadd.f32 %v739, %v903
        %v936 = vadd.f32 %v740, %v904
        %v937 = vadd.f32 %v741, %v905
        %v938 = vadd.f32 %v742, %v906
        %v939 = vadd.f32 %v743, %v907
        %v940 = vadd.f32 %v744, %v908
        %v941 = vadd.f32 %v745, %v909
        %v942 = vadd.f32 %v746, %v910
        %v943 = vadd.f32 %v747, %v911
        %v944 = vadd.f32 %v748, %v912
        %v945 = vadd.f32 %v749, %v913
        %v946 = vadd.f32 %v750, %v914
        %v947 = vadd.f32 %v751, %v915
        %v948 = vadd.f32 %v752, %v916
        %v949 = vadd.f32 %v753, %v917
        %v950 = vadd.f32 %v754, %v918
        %v951 = vadd.f32 %v755, %v919
        %v952 = vadd.f32 %v756, %v920
        %v953 = vadd.f32 %v757, %v921
        %v954 = vadd.f32 %v758, %v922
        %v955 = vadd.f32 %v759, %v923
        %v956 = vadd.f32 %v760, %v924
        %v957 = vld [vmem:[%s2] sm:$0x1]
        %v959 = vlaneseq
        %v960 = vshrl.u32 %v959, 7
        %v961 = vsub.s32 0, %v960
        %v962 = vrot.slane %v957, %v961
        %v964 = vadd.f32 %v925, %v962
        %v965 = vadd.f32 %v926, %v962
        %v966 = vadd.f32 %v927, %v962
        %v967 = vadd.f32 %v928, %v962
        %v968 = vadd.f32 %v929, %v962
        %v969 = vadd.f32 %v930, %v962
        %v970 = vadd.f32 %v931, %v962
        %v971 = vadd.f32 %v932, %v962
        %v972 = vadd.f32 %v933, %v962
        %v973 = vadd.f32 %v934, %v962
        %v974 = vadd.f32 %v935, %v962
        %v975 = vadd.f32 %v936, %v962
        %v976 = vadd.f32 %v937, %v962
        %v977 = vadd.f32 %v938, %v962
        %v978 = vadd.f32 %v939, %v962
        %v979 = vadd.f32 %v940, %v962
        %v980 = vadd.f32 %v941, %v962
        %v981 = vadd.f32 %v942, %v962
        %v982 = vadd.f32 %v943, %v962
        %v983 = vadd.f32 %v944, %v962
        %v984 = vadd.f32 %v945, %v962
        %v985 = vadd.f32 %v946, %v962
        %v986 = vadd.f32 %v947, %v962
        %v987 = vadd.f32 %v948, %v962
        %v988 = vadd.f32 %v949, %v962
        %v989 = vadd.f32 %v950, %v962
        %v990 = vadd.f32 %v951, %v962
        %v991 = vadd.f32 %v952, %v962
        %v992 = vadd.f32 %v953, %v962
        %v993 = vadd.f32 %v954, %v962
        %v994 = vadd.f32 %v955, %v962
        %v995 = vadd.f32 %v956, %v962
        %v996 = vmax.f32 %v964, 0.0
        %v997 = vmax.f32 %v965, 0.0
        %v998 = vmax.f32 %v966, 0.0
        %v999 = vmax.f32 %v967, 0.0
        %v1000 = vmax.f32 %v968, 0.0
        %v1001 = vmax.f32 %v969, 0.0
        %v1002 = vmax.f32 %v970, 0.0
        %v1003 = vmax.f32 %v971, 0.0
        %v1004 = vmax.f32 %v972, 0.0
        %v1005 = vmax.f32 %v973, 0.0
        %v1006 = vmax.f32 %v974, 0.0
        %v1007 = vmax.f32 %v975, 0.0
        %v1008 = vmax.f32 %v976, 0.0
        %v1009 = vmax.f32 %v977, 0.0
        %v1010 = vmax.f32 %v978, 0.0
        %v1011 = vmax.f32 %v979, 0.0
        %v1012 = vmax.f32 %v980, 0.0
        %v1013 = vmax.f32 %v981, 0.0
        %v1014 = vmax.f32 %v982, 0.0
        %v1015 = vmax.f32 %v983, 0.0
        %v1016 = vmax.f32 %v984, 0.0
        %v1017 = vmax.f32 %v985, 0.0
        %v1018 = vmax.f32 %v986, 0.0
        %v1019 = vmax.f32 %v987, 0.0
        %v1020 = vmax.f32 %v988, 0.0
        %v1021 = vmax.f32 %v989, 0.0
        %v1022 = vmax.f32 %v990, 0.0
        %v1023 = vmax.f32 %v991, 0.0
        %v1024 = vmax.f32 %v992, 0.0
        %v1025 = vmax.f32 %v993, 0.0
        %v1026 = vmax.f32 %v994, 0.0
        %v1027 = vmax.f32 %v995, 0.0
        %v1028 = vpack.c.bf16 %v997, %v996
        %v1029 = vpack.c.bf16 %v999, %v998
        %v1030 = vpack.c.bf16 %v1001, %v1000
        %v1031 = vpack.c.bf16 %v1003, %v1002
        %v1032 = vpack.c.bf16 %v1005, %v1004
        %v1033 = vpack.c.bf16 %v1007, %v1006
        %v1034 = vpack.c.bf16 %v1009, %v1008
        %v1035 = vpack.c.bf16 %v1011, %v1010
        %v1036 = vpack.c.bf16 %v1013, %v1012
        %v1037 = vpack.c.bf16 %v1015, %v1014
        %v1038 = vpack.c.bf16 %v1017, %v1016
        %v1039 = vpack.c.bf16 %v1019, %v1018
        %v1040 = vpack.c.bf16 %v1021, %v1020
        %v1041 = vpack.c.bf16 %v1023, %v1022
        %v1042 = vpack.c.bf16 %v1025, %v1024
        %v1043 = vpack.c.bf16 %v1027, %v1026
        %v1044 = vld [vmem:[%s3] sm:$0xf]
        %v1045 = vld [vmem:[%s3 + $0x4] sm:$0xf]
        %v1046 = vld [vmem:[%s3 + $0x8] sm:$0xf]
        %v1047 = vld [vmem:[%s3 + $0xc] sm:$0xf]
        %v1048 = vld [vmem:[%s3 + $0x10] sm:$0xf]
        %v1049 = vld [vmem:[%s3 + $0x14] sm:$0xf]
        %v1050 = vld [vmem:[%s3 + $0x18] sm:$0xf]
        %v1051 = vld [vmem:[%s3 + $0x1c] sm:$0xf]
        %v1052 = vld [vmem:[%s4] sm:$0x1]
        %v1054 = vlaneseq
        %v1055 = vshrl.u32 %v1054, 7
        %v1056 = vsub.s32 0, %v1055
        %v1057 = vrot.slane %v1052, %v1056
        %v1067 = vunpack.c.l.b16 %v1044
        %v1068 = vunpack.c.l.b16 %v1045
        %v1069 = vunpack.c.l.b16 %v1046
        %v1070 = vunpack.c.l.b16 %v1047
        %v1071 = vunpack.c.l.b16 %v1048
        %v1072 = vunpack.c.l.b16 %v1049
        %v1073 = vunpack.c.l.b16 %v1050
        %v1074 = vunpack.c.l.b16 %v1051
        %v1075 = vpack.c.b16 %v1068, %v1067
        %v1076 = vpack.c.b16 %v1070, %v1069
        %v1077 = vpack.c.b16 %v1072, %v1071
        %v1078 = vpack.c.b16 %v1074, %v1073
        %vm1083 = vcmask 523264
        %v1085 = vsel %vm1083, %v1028, 0
        %v1088 = vsel %vm1083, %v1029, 0
        %v1091 = vsel %vm1083, %v1030, 0
        %v1094 = vsel %vm1083, %v1031, 0
        %v1097 = vsel %vm1083, %v1032, 0
        %v1100 = vsel %vm1083, %v1033, 0
        %v1103 = vsel %vm1083, %v1034, 0
        %v1106 = vsel %vm1083, %v1035, 0
        %v1109 = vsel %vm1083, %v1036, 0
        %v1112 = vsel %vm1083, %v1037, 0
        %v1115 = vsel %vm1083, %v1038, 0
        %v1118 = vsel %vm1083, %v1039, 0
        %v1121 = vsel %vm1083, %v1040, 0
        %v1124 = vsel %vm1083, %v1041, 0
        %v1127 = vsel %vm1083, %v1042, 0
        %v1130 = vsel %vm1083, %v1043, 0
        %1132 = vmatprep.subr.bf16.mxu0 0
        %1133 = vmatpush1.bf16.msra.mxu0 %v1075
        %1134 = vmatprep.subr.bf16.mxu0 0
        %1135 = vmatpush1.bf16.msra.mxu0 %v1076
        %1136 = vmatprep.subr.bf16.mxu0 0
        %1137 = vmatpush1.bf16.msra.mxu0 %v1077
        %1138 = vmatprep.subr.bf16.mxu0 0
        %1139 = vmatpush1.bf16.msra.mxu0 %v1078
        %1140 = vmatprep.subr.bf16.mxu0 0
        %1141 = vmatpush1.bf16.msra.mxu0 0
        %1142 = vmatprep.subr.bf16.mxu0 0
        %1143 = vmatpush1.bf16.msra.mxu0 0
        %1144 = vmatprep.subr.bf16.mxu0 0
        %1145 = vmatpush1.bf16.msra.mxu0 0
        %1146 = vmatprep.subr.bf16.mxu0 0
        %1147 = vmatpush1.bf16.msra.mxu0 0
        %1148 = vmatprep.subr.bf16.mxu0 0
        %1149 = vmatpush1.bf16.msra.mxu0 0
        %1150 = vmatprep.subr.bf16.mxu0 0
        %1151 = vmatpush1.bf16.msra.mxu0 0
        %1152 = vmatprep.subr.bf16.mxu0 0
        %1153 = vmatpush1.bf16.msra.mxu0 0
        %1154 = vmatprep.subr.bf16.mxu0 0
        %1155 = vmatpush1.bf16.msra.mxu0 0
        %1156 = vmatprep.subr.bf16.mxu0 0
        %1157 = vmatpush1.bf16.msra.mxu0 0
        %1158 = vmatprep.subr.bf16.mxu0 0
        %1159 = vmatpush1.bf16.msra.mxu0 0
        %1160 = vmatprep.subr.bf16.mxu0 0
        %1161 = vmatpush1.bf16.msra.mxu0 0
        %1162 = vmatprep.subr.bf16.mxu0 0
        %1163 = vmatpush1.bf16.msra.mxu0 0
        %1164 = vmatprep.mubr.bf16.mxu0 0
        %1165 = vmatmul.mubr.bf16.gmra.mrb[0].mxu0 %v1085
        %v1166 = vpop.f32.mrb[0].mxu0
        %v1167 = vadd.f32 %v1057, %v1166
        %v1168 = vpop.f32.mrb[0].mxu0
        %v1169 = vpop.f32.mrb[0].mxu0
        %v1170 = vadd.f32 %v1057, %v1169
        %v1171 = vpop.f32.mrb[0].mxu0
        %1172 = vmatprep.mubr.bf16.mxu0 0
        %1173 = vmatmul.mubr.bf16.gmra.mrb[0].mxu0 %v1088
        %v1174 = vpop.f32.mrb[0].mxu0
        %v1175 = vadd.f32 %v1057, %v1174
        %v1176 = vpop.f32.mrb[0].mxu0
        %v1177 = vpop.f32.mrb[0].mxu0
        %v1178 = vadd.f32 %v1057, %v1177
        %v1179 = vpop.f32.mrb[0].mxu0
        %1180 = vmatprep.mubr.bf16.mxu0 0
        %1181 = vmatmul.mubr.bf16.gmra.mrb[0].mxu0 %v1091
        %v1182 = vpop.f32.mrb[0].mxu0
        %v1183 = vadd.f32 %v1057, %v1182
        %v1184 = vpop.f32.mrb[0].mxu0
        %v1185 = vpop.f32.mrb[0].mxu0
        %v1186 = vadd.f32 %v1057, %v1185
        %v1187 = vpop.f32.mrb[0].mxu0
        %1188 = vmatprep.mubr.bf16.mxu0 0
        %1189 = vmatmul.mubr.bf16.gmra.mrb[0].mxu0 %v1094
        %v1190 = vpop.f32.mrb[0].mxu0
        %v1191 = vadd.f32 %v1057, %v1190
        %v1192 = vpop.f32.mrb[0].mxu0
        %v1193 = vpop.f32.mrb[0].mxu0
        %v1194 = vadd.f32 %v1057, %v1193
        %v1195 = vpop.f32.mrb[0].mxu0
        %1196 = vmatprep.mubr.bf16.mxu0 0
        %1197 = vmatmul.mubr.bf16.gmra.mrb[0].mxu0 %v1097
        %v1198 = vpop.f32.mrb[0].mxu0
        %v1199 = vadd.f32 %v1057, %v1198
        %v1200 = vpop.f32.mrb[0].mxu0
        %v1201 = vpop.f32.mrb[0].mxu0
        %v1202 = vadd.f32 %v1057, %v1201
        %v1203 = vpop.f32.mrb[0].mxu0
        %1204 = vmatprep.mubr.bf16.mxu0 0
        %1205 = vmatmul.mubr.bf16.gmra.mrb[0].mxu0 %v1100
        %v1206 = vpop.f32.mrb[0].mxu0
        %v1207 = vadd.f32 %v1057, %v1206
        %v1208 = vpop.f32.mrb[0].mxu0
        %v1209 = vpop.f32.mrb[0].mxu0
        %v1210 = vadd.f32 %v1057, %v1209
        %v1211 = vpop.f32.mrb[0].mxu0
        %1212 = vmatprep.mubr.bf16.mxu0 0
        %1213 = vmatmul.mubr.bf16.gmra.mrb[0].mxu0 %v1103
        %v1214 = vpop.f32.mrb[0].mxu0
        %v1215 = vadd.f32 %v1057, %v1214
        %v1216 = vpop.f32.mrb[0].mxu0
        %v1217 = vpop.f32.mrb[0].mxu0
        %v1218 = vadd.f32 %v1057, %v1217
        %v1219 = vpop.f32.mrb[0].mxu0
        %1220 = vmatprep.mubr.bf16.mxu0 0
        %1221 = vmatmul.mubr.bf16.gmra.mrb[0].mxu0 %v1106
        %v1222 = vpop.f32.mrb[0].mxu0
        %v1223 = vadd.f32 %v1057, %v1222
        %v1224 = vpop.f32.mrb[0].mxu0
        %v1225 = vpop.f32.mrb[0].mxu0
        %v1226 = vadd.f32 %v1057, %v1225
        %v1227 = vpop.f32.mrb[0].mxu0
        %1228 = vmatprep.mubr.bf16.mxu0 0
        %1229 = vmatmul.mubr.bf16.gmra.mrb[0].mxu0 %v1109
        %v1230 = vpop.f32.mrb[0].mxu0
        %v1231 = vadd.f32 %v1057, %v1230
        %v1232 = vpop.f32.mrb[0].mxu0
        %v1233 = vpop.f32.mrb[0].mxu0
        %v1234 = vadd.f32 %v1057, %v1233
        %v1235 = vpop.f32.mrb[0].mxu0
        %1236 = vmatprep.mubr.bf16.mxu0 0
        %1237 = vmatmul.mubr.bf16.gmra.mrb[0].mxu0 %v1112
        %v1238 = vpop.f32.mrb[0].mxu0
        %v1239 = vadd.f32 %v1057, %v1238
        %v1240 = vpop.f32.mrb[0].mxu0
        %v1241 = vpop.f32.mrb[0].mxu0
        %v1242 = vadd.f32 %v1057, %v1241
        %v1243 = vpop.f32.mrb[0].mxu0
        %1244 = vmatprep.mubr.bf16.mxu0 0
        %1245 = vmatmul.mubr.bf16.gmra.mrb[0].mxu0 %v1115
        %v1246 = vpop.f32.mrb[0].mxu0
        %v1247 = vadd.f32 %v1057, %v1246
        %v1248 = vpop.f32.mrb[0].mxu0
        %v1249 = vpop.f32.mrb[0].mxu0
        %v1250 = vadd.f32 %v1057, %v1249
        %v1251 = vpop.f32.mrb[0].mxu0
        %1252 = vmatprep.mubr.bf16.mxu0 0
        %1253 = vmatmul.mubr.bf16.gmra.mrb[0].mxu0 %v1118
        %v1254 = vpop.f32.mrb[0].mxu0
        %v1255 = vadd.f32 %v1057, %v1254
        %v1256 = vpop.f32.mrb[0].mxu0
        %v1257 = vpop.f32.mrb[0].mxu0
        %v1258 = vadd.f32 %v1057, %v1257
        %v1259 = vpop.f32.mrb[0].mxu0
        %1260 = vmatprep.mubr.bf16.mxu0 0
        %1261 = vmatmul.mubr.bf16.gmra.mrb[0].mxu0 %v1121
        %v1262 = vpop.f32.mrb[0].mxu0
        %v1263 = vadd.f32 %v1057, %v1262
        %v1264 = vpop.f32.mrb[0].mxu0
        %v1265 = vpop.f32.mrb[0].mxu0
        %v1266 = vadd.f32 %v1057, %v1265
        %v1267 = vpop.f32.mrb[0].mxu0
        %1268 = vmatprep.mubr.bf16.mxu0 0
        %1269 = vmatmul.mubr.bf16.gmra.mrb[0].mxu0 %v1124
        %v1270 = vpop.f32.mrb[0].mxu0
        %v1271 = vadd.f32 %v1057, %v1270
        %v1272 = vpop.f32.mrb[0].mxu0
        %v1273 = vpop.f32.mrb[0].mxu0
        %v1274 = vadd.f32 %v1057, %v1273
        %v1275 = vpop.f32.mrb[0].mxu0
        %1276 = vmatprep.mubr.bf16.mxu0 0
        %1277 = vmatmul.mubr.bf16.gmra.mrb[0].mxu0 %v1127
        %v1278 = vpop.f32.mrb[0].mxu0
        %v1279 = vadd.f32 %v1057, %v1278
        %v1280 = vpop.f32.mrb[0].mxu0
        %v1281 = vpop.f32.mrb[0].mxu0
        %v1282 = vadd.f32 %v1057, %v1281
        %v1283 = vpop.f32.mrb[0].mxu0
        %1284 = vmatprep.mubr.bf16.mxu0 0
        %1285 = vmatmul.mubr.bf16.gmra.mrb[0].mxu0 %v1130
        %v1286 = vpop.f32.mrb[0].mxu0
        %v1287 = vadd.f32 %v1057, %v1286
        %v1288 = vpop.f32.mrb[0].mxu0
        %v1289 = vpop.f32.mrb[0].mxu0
        %v1290 = vadd.f32 %v1057, %v1289
        %v1291 = vpop.f32.mrb[0].mxu0
        %1292 = vdwg.mxu0
        %v1293 = vmax.f32 %v1167, 0.0
        %v1294 = vmax.f32 %v1170, 0.0
        %v1295 = vmax.f32 %v1175, 0.0
        %v1296 = vmax.f32 %v1178, 0.0
        %v1297 = vmax.f32 %v1183, 0.0
        %v1298 = vmax.f32 %v1186, 0.0
        %v1299 = vmax.f32 %v1191, 0.0
        %v1300 = vmax.f32 %v1194, 0.0
        %v1301 = vmax.f32 %v1199, 0.0
        %v1302 = vmax.f32 %v1202, 0.0
        %v1303 = vmax.f32 %v1207, 0.0
        %v1304 = vmax.f32 %v1210, 0.0
        %v1305 = vmax.f32 %v1215, 0.0
        %v1306 = vmax.f32 %v1218, 0.0
        %v1307 = vmax.f32 %v1223, 0.0
        %v1308 = vmax.f32 %v1226, 0.0
        %v1309 = vmax.f32 %v1231, 0.0
        %v1310 = vmax.f32 %v1234, 0.0
        %v1311 = vmax.f32 %v1239, 0.0
        %v1312 = vmax.f32 %v1242, 0.0
        %v1313 = vmax.f32 %v1247, 0.0
        %v1314 = vmax.f32 %v1250, 0.0
        %v1315 = vmax.f32 %v1255, 0.0
        %v1316 = vmax.f32 %v1258, 0.0
        %v1317 = vmax.f32 %v1263, 0.0
        %v1318 = vmax.f32 %v1266, 0.0
        %v1319 = vmax.f32 %v1271, 0.0
        %v1320 = vmax.f32 %v1274, 0.0
        %v1321 = vmax.f32 %v1279, 0.0
        %v1322 = vmax.f32 %v1282, 0.0
        %v1323 = vmax.f32 %v1287, 0.0
        %v1324 = vmax.f32 %v1290, 0.0
        %v1325 = vpack.c.bf16 %v1294, %v1293
        %v1326 = vpack.c.bf16 %v1296, %v1295
        %v1327 = vpack.c.bf16 %v1298, %v1297
        %v1328 = vpack.c.bf16 %v1300, %v1299
        %v1329 = vpack.c.bf16 %v1302, %v1301
        %v1330 = vpack.c.bf16 %v1304, %v1303
        %v1331 = vpack.c.bf16 %v1306, %v1305
        %v1332 = vpack.c.bf16 %v1308, %v1307
        %v1333 = vpack.c.bf16 %v1310, %v1309
        %v1334 = vpack.c.bf16 %v1312, %v1311
        %v1335 = vpack.c.bf16 %v1314, %v1313
        %v1336 = vpack.c.bf16 %v1316, %v1315
        %v1337 = vpack.c.bf16 %v1318, %v1317
        %v1338 = vpack.c.bf16 %v1320, %v1319
        %v1339 = vpack.c.bf16 %v1322, %v1321
        %v1340 = vpack.c.bf16 %v1324, %v1323
        %v1341 = vld [vmem:[%s5] sm:$0xf]
        %v1342 = vld [vmem:[%s5 + $0x4] sm:$0xf]
        %v1343 = vld [vmem:[%s5 + $0x8] sm:$0xf]
        %v1344 = vld [vmem:[%s5 + $0xc] sm:$0xf]
        %v1345 = vld [vmem:[%s5 + $0x10] sm:$0xf]
        %v1346 = vld [vmem:[%s5 + $0x14] sm:$0xf]
        %v1347 = vld [vmem:[%s5 + $0x18] sm:$0xf]
        %v1348 = vld [vmem:[%s5 + $0x1c] sm:$0xf]
        %v1349 = vld [vmem:[%s5 + $0x20] sm:$0xf]
        %v1350 = vld [vmem:[%s5 + $0x24] sm:$0xf]
        %v1351 = vld [vmem:[%s5 + $0x28] sm:$0xf]
        %v1352 = vld [vmem:[%s5 + $0x2c] sm:$0xf]
        %v1353 = vld [vmem:[%s5 + $0x30] sm:$0xf]
        %v1354 = vld [vmem:[%s5 + $0x34] sm:$0xf]
        %v1355 = vld [vmem:[%s5 + $0x38] sm:$0xf]
        %v1356 = vld [vmem:[%s5 + $0x3c] sm:$0xf]
        %v1357 = vld [vmem:[%s6] sm:$0x1]
        %v1359 = vlaneseq
        %v1360 = vshrl.u32 %v1359, 7
        %v1361 = vsub.s32 0, %v1360
        %v1362 = vrot.slane %v1357, %v1361
        %v1380 = vunpack.c.l.b16 %v1341
        %v1381 = vunpack.c.l.b16 %v1342
        %v1382 = vunpack.c.l.b16 %v1343
        %v1383 = vunpack.c.l.b16 %v1344
        %v1384 = vunpack.c.l.b16 %v1345
        %v1385 = vunpack.c.l.b16 %v1346
        %v1386 = vunpack.c.l.b16 %v1347
        %v1387 = vunpack.c.l.b16 %v1348
        %v1388 = vunpack.c.l.b16 %v1349
        %v1389 = vunpack.c.l.b16 %v1350
        %v1390 = vunpack.c.l.b16 %v1351
        %v1391 = vunpack.c.l.b16 %v1352
        %v1392 = vunpack.c.l.b16 %v1353
        %v1393 = vunpack.c.l.b16 %v1354
        %v1394 = vunpack.c.l.b16 %v1355
        %v1395 = vunpack.c.l.b16 %v1356
        %v1396 = vpack.c.b16 %v1381, %v1380
        %v1397 = vpack.c.b16 %v1383, %v1382
        %v1398 = vpack.c.b16 %v1385, %v1384
        %v1399 = vpack.c.b16 %v1387, %v1386
        %v1400 = vpack.c.b16 %v1389, %v1388
        %v1401 = vpack.c.b16 %v1391, %v1390
        %v1402 = vpack.c.b16 %v1393, %v1392
        %v1403 = vpack.c.b16 %v1395, %v1394
        %1412 = vmatprep.subr.bf16.mxu0 0
        %1413 = vmatpush1.bf16.msra.mxu0 %v1396
        %1414 = vmatprep.subr.bf16.mxu0 0
        %1415 = vmatpush1.bf16.msra.mxu0 %v1397
        %1416 = vmatprep.subr.bf16.mxu0 0
        %1417 = vmatpush1.bf16.msra.mxu0 %v1398
        %1418 = vmatprep.subr.bf16.mxu0 0
        %1419 = vmatpush1.bf16.msra.mxu0 %v1399
        %1420 = vmatprep.subr.bf16.mxu0 0
        %1421 = vmatpush1.bf16.msra.mxu0 %v1400
        %1422 = vmatprep.subr.bf16.mxu0 0
        %1423 = vmatpush1.bf16.msra.mxu0 %v1401
        %1424 = vmatprep.subr.bf16.mxu0 0
        %1425 = vmatpush1.bf16.msra.mxu0 %v1402
        %1426 = vmatprep.subr.bf16.mxu0 0
        %1427 = vmatpush1.bf16.msra.mxu0 %v1403
        %1428 = vmatprep.subr.bf16.mxu0 0
        %1429 = vmatpush1.bf16.msra.mxu0 0
        %1430 = vmatprep.subr.bf16.mxu0 0
        %1431 = vmatpush1.bf16.msra.mxu0 0
        %1432 = vmatprep.subr.bf16.mxu0 0
        %1433 = vmatpush1.bf16.msra.mxu0 0
        %1434 = vmatprep.subr.bf16.mxu0 0
        %1435 = vmatpush1.bf16.msra.mxu0 0
        %1436 = vmatprep.subr.bf16.mxu0 0
        %1437 = vmatpush1.bf16.msra.mxu0 0
        %1438 = vmatprep.subr.bf16.mxu0 0
        %1439 = vmatpush1.bf16.msra.mxu0 0
        %1440 = vmatprep.subr.bf16.mxu0 0
        %1441 = vmatpush1.bf16.msra.mxu0 0
        %1442 = vmatprep.subr.bf16.mxu0 0
        %1443 = vmatpush1.bf16.msra.mxu0 0
        %1444 = vmatprep.mubr.bf16.mxu0 0
        %1445 = vmatmul.mubr.bf16.gmra.mrb[0].mxu0 %v1325
        %v1446 = vpop.f32.mrb[0].mxu0
        %v1447 = vadd.f32 %v1362, %v1446
        %v1448 = vpop.f32.mrb[0].mxu0
        %v1449 = vpop.f32.mrb[0].mxu0
        %v1450 = vadd.f32 %v1362, %v1449
        %v1451 = vpop.f32.mrb[0].mxu0
        %1452 = vmatprep.mubr.bf16.mxu0 0
        %1453 = vmatmul.mubr.bf16.gmra.mrb[0].mxu0 %v1326
        %v1454 = vpop.f32.mrb[0].mxu0
        %v1455 = vadd.f32 %v1362, %v1454
        %v1456 = vpop.f32.mrb[0].mxu0
        %v1457 = vpop.f32.mrb[0].mxu0
        %v1458 = vadd.f32 %v1362, %v1457
        %v1459 = vpop.f32.mrb[0].mxu0
        %1460 = vmatprep.mubr.bf16.mxu0 0
        %1461 = vmatmul.mubr.bf16.gmra.mrb[0].mxu0 %v1327
        %v1462 = vpop.f32.mrb[0].mxu0
        %v1463 = vadd.f32 %v1362, %v1462
        %v1464 = vpop.f32.mrb[0].mxu0
        %v1465 = vpop.f32.mrb[0].mxu0
        %v1466 = vadd.f32 %v1362, %v1465
        %v1467 = vpop.f32.mrb[0].mxu0
        %1468 = vmatprep.mubr.bf16.mxu0 0
        %1469 = vmatmul.mubr.bf16.gmra.mrb[0].mxu0 %v1328
        %v1470 = vpop.f32.mrb[0].mxu0
        %v1471 = vadd.f32 %v1362, %v1470
        %v1472 = vpop.f32.mrb[0].mxu0
        %v1473 = vpop.f32.mrb[0].mxu0
        %v1474 = vadd.f32 %v1362, %v1473
        %v1475 = vpop.f32.mrb[0].mxu0
        %1476 = vmatprep.mubr.bf16.mxu0 0
        %1477 = vmatmul.mubr.bf16.gmra.mrb[0].mxu0 %v1329
        %v1478 = vpop.f32.mrb[0].mxu0
        %v1479 = vadd.f32 %v1362, %v1478
        %v1480 = vpop.f32.mrb[0].mxu0
        %v1481 = vpop.f32.mrb[0].mxu0
        %v1482 = vadd.f32 %v1362, %v1481
        %v1483 = vpop.f32.mrb[0].mxu0
        %1484 = vmatprep.mubr.bf16.mxu0 0
        %1485 = vmatmul.mubr.bf16.gmra.mrb[0].mxu0 %v1330
        %v1486 = vpop.f32.mrb[0].mxu0
        %v1487 = vadd.f32 %v1362, %v1486
        %v1488 = vpop.f32.mrb[0].mxu0
        %v1489 = vpop.f32.mrb[0].mxu0
        %v1490 = vadd.f32 %v1362, %v1489
        %v1491 = vpop.f32.mrb[0].mxu0
        %1492 = vmatprep.mubr.bf16.mxu0 0
        %1493 = vmatmul.mubr.bf16.gmra.mrb[0].mxu0 %v1331
        %v1494 = vpop.f32.mrb[0].mxu0
        %v1495 = vadd.f32 %v1362, %v1494
        %v1496 = vpop.f32.mrb[0].mxu0
        %v1497 = vpop.f32.mrb[0].mxu0
        %v1498 = vadd.f32 %v1362, %v1497
        %v1499 = vpop.f32.mrb[0].mxu0
        %1500 = vmatprep.mubr.bf16.mxu0 0
        %1501 = vmatmul.mubr.bf16.gmra.mrb[0].mxu0 %v1332
        %v1502 = vpop.f32.mrb[0].mxu0
        %v1503 = vadd.f32 %v1362, %v1502
        %v1504 = vpop.f32.mrb[0].mxu0
        %v1505 = vpop.f32.mrb[0].mxu0
        %v1506 = vadd.f32 %v1362, %v1505
        %v1507 = vpop.f32.mrb[0].mxu0
        %1508 = vmatprep.mubr.bf16.mxu0 0
        %1509 = vmatmul.mubr.bf16.gmra.mrb[0].mxu0 %v1333
        %v1510 = vpop.f32.mrb[0].mxu0
        %v1511 = vadd.f32 %v1362, %v1510
        %v1512 = vpop.f32.mrb[0].mxu0
        %v1513 = vpop.f32.mrb[0].mxu0
        %v1514 = vadd.f32 %v1362, %v1513
        %v1515 = vpop.f32.mrb[0].mxu0
        %1516 = vmatprep.mubr.bf16.mxu0 0
        %1517 = vmatmul.mubr.bf16.gmra.mrb[0].mxu0 %v1334
        %v1518 = vpop.f32.mrb[0].mxu0
        %v1519 = vadd.f32 %v1362, %v1518
        %v1520 = vpop.f32.mrb[0].mxu0
        %v1521 = vpop.f32.mrb[0].mxu0
        %v1522 = vadd.f32 %v1362, %v1521
        %v1523 = vpop.f32.mrb[0].mxu0
        %1524 = vmatprep.mubr.bf16.mxu0 0
        %1525 = vmatmul.mubr.bf16.gmra.mrb[0].mxu0 %v1335
        %v1526 = vpop.f32.mrb[0].mxu0
        %v1527 = vadd.f32 %v1362, %v1526
        %v1528 = vpop.f32.mrb[0].mxu0
        %v1529 = vpop.f32.mrb[0].mxu0
        %v1530 = vadd.f32 %v1362, %v1529
        %v1531 = vpop.f32.mrb[0].mxu0
        %1532 = vmatprep.mubr.bf16.mxu0 0
        %1533 = vmatmul.mubr.bf16.gmra.mrb[0].mxu0 %v1336
        %v1534 = vpop.f32.mrb[0].mxu0
        %v1535 = vadd.f32 %v1362, %v1534
        %v1536 = vpop.f32.mrb[0].mxu0
        %v1537 = vpop.f32.mrb[0].mxu0
        %v1538 = vadd.f32 %v1362, %v1537
        %v1539 = vpop.f32.mrb[0].mxu0
        %1540 = vmatprep.mubr.bf16.mxu0 0
        %1541 = vmatmul.mubr.bf16.gmra.mrb[0].mxu0 %v1337
        %v1542 = vpop.f32.mrb[0].mxu0
        %v1543 = vadd.f32 %v1362, %v1542
        %v1544 = vpop.f32.mrb[0].mxu0
        %v1545 = vpop.f32.mrb[0].mxu0
        %v1546 = vadd.f32 %v1362, %v1545
        %v1547 = vpop.f32.mrb[0].mxu0
        %1548 = vmatprep.mubr.bf16.mxu0 0
        %1549 = vmatmul.mubr.bf16.gmra.mrb[0].mxu0 %v1338
        %v1550 = vpop.f32.mrb[0].mxu0
        %v1551 = vadd.f32 %v1362, %v1550
        %v1552 = vpop.f32.mrb[0].mxu0
        %v1553 = vpop.f32.mrb[0].mxu0
        %v1554 = vadd.f32 %v1362, %v1553
        %v1555 = vpop.f32.mrb[0].mxu0
        %1556 = vmatprep.mubr.bf16.mxu0 0
        %1557 = vmatmul.mubr.bf16.gmra.mrb[0].mxu0 %v1339
        %v1558 = vpop.f32.mrb[0].mxu0
        %v1559 = vadd.f32 %v1362, %v1558
        %v1560 = vpop.f32.mrb[0].mxu0
        %v1561 = vpop.f32.mrb[0].mxu0
        %v1562 = vadd.f32 %v1362, %v1561
        %v1563 = vpop.f32.mrb[0].mxu0
        %1564 = vmatprep.mubr.bf16.mxu0 0
        %1565 = vmatmul.mubr.bf16.gmra.mrb[0].mxu0 %v1340
        %v1566 = vpop.f32.mrb[0].mxu0
        %v1567 = vadd.f32 %v1362, %v1566
        %v1568 = vpop.f32.mrb[0].mxu0
        %v1569 = vpop.f32.mrb[0].mxu0
        %v1570 = vadd.f32 %v1362, %v1569
        %v1571 = vpop.f32.mrb[0].mxu0
        %1572 = vdwg.mxu0
        %v1573 = vmax.f32 %v1447, 0.0
        %v1574 = vmax.f32 %v1450, 0.0
        %v1575 = vmax.f32 %v1455, 0.0
        %v1576 = vmax.f32 %v1458, 0.0
        %v1577 = vmax.f32 %v1463, 0.0
        %v1578 = vmax.f32 %v1466, 0.0
        %v1579 = vmax.f32 %v1471, 0.0
        %v1580 = vmax.f32 %v1474, 0.0
        %v1581 = vmax.f32 %v1479, 0.0
        %v1582 = vmax.f32 %v1482, 0.0
        %v1583 = vmax.f32 %v1487, 0.0
        %v1584 = vmax.f32 %v1490, 0.0
        %v1585 = vmax.f32 %v1495, 0.0
        %v1586 = vmax.f32 %v1498, 0.0
        %v1587 = vmax.f32 %v1503, 0.0
        %v1588 = vmax.f32 %v1506, 0.0
        %v1589 = vmax.f32 %v1511, 0.0
        %v1590 = vmax.f32 %v1514, 0.0
        %v1591 = vmax.f32 %v1519, 0.0
        %v1592 = vmax.f32 %v1522, 0.0
        %v1593 = vmax.f32 %v1527, 0.0
        %v1594 = vmax.f32 %v1530, 0.0
        %v1595 = vmax.f32 %v1535, 0.0
        %v1596 = vmax.f32 %v1538, 0.0
        %v1597 = vmax.f32 %v1543, 0.0
        %v1598 = vmax.f32 %v1546, 0.0
        %v1599 = vmax.f32 %v1551, 0.0
        %v1600 = vmax.f32 %v1554, 0.0
        %v1601 = vmax.f32 %v1559, 0.0
        %v1602 = vmax.f32 %v1562, 0.0
        %v1603 = vmax.f32 %v1567, 0.0
        %v1604 = vmax.f32 %v1570, 0.0
        %v1605 = vld [vmem:[%s7] sm:$0xff]
        %v1607 = vsel %vm1083, %v1605, 0
        %v1610 = vsel %vm1083, %v1573, 0
        %v1613 = vsel %vm1083, %v1574, 0
        %v1616 = vsel %vm1083, %v1575, 0
        %v1619 = vsel %vm1083, %v1576, 0
        %v1622 = vsel %vm1083, %v1577, 0
        %v1625 = vsel %vm1083, %v1578, 0
        %v1628 = vsel %vm1083, %v1579, 0
        %v1631 = vsel %vm1083, %v1580, 0
        %v1634 = vsel %vm1083, %v1581, 0
        %v1637 = vsel %vm1083, %v1582, 0
        %v1640 = vsel %vm1083, %v1583, 0
        %v1643 = vsel %vm1083, %v1584, 0
        %v1646 = vsel %vm1083, %v1585, 0
        %v1649 = vsel %vm1083, %v1586, 0
        %v1652 = vsel %vm1083, %v1587, 0
        %v1655 = vsel %vm1083, %v1588, 0
        %v1658 = vsel %vm1083, %v1589, 0
        %v1661 = vsel %vm1083, %v1590, 0
        %v1664 = vsel %vm1083, %v1591, 0
        %v1667 = vsel %vm1083, %v1592, 0
        %v1670 = vsel %vm1083, %v1593, 0
        %v1673 = vsel %vm1083, %v1594, 0
        %v1676 = vsel %vm1083, %v1595, 0
        %v1679 = vsel %vm1083, %v1596, 0
        %v1682 = vsel %vm1083, %v1597, 0
        %v1685 = vsel %vm1083, %v1598, 0
        %v1688 = vsel %vm1083, %v1599, 0
        %v1691 = vsel %vm1083, %v1600, 0
        %v1694 = vsel %vm1083, %v1601, 0
        %v1697 = vsel %vm1083, %v1602, 0
        %v1700 = vsel %vm1083, %v1603, 0
        %v1703 = vsel %vm1083, %v1604, 0
        %1705 = vmatprep.subr.mxu0 0.0
        %1706 = vmatpush1.xpose.msra.mxu0 %v1610
        %1707 = vmatprep.subr.mxu0 0.0
        %1708 = vmatpush1.xpose.msra.mxu0 %v1613
        %1709 = vmatprep.subr.mxu0 0.0
        %1710 = vmatpush1.xpose.msra.mxu0 %v1616
        %1711 = vmatprep.subr.mxu0 0.0
        %1712 = vmatpush1.xpose.msra.mxu0 %v1619
        %1713 = vmatprep.subr.mxu0 0.0
        %1714 = vmatpush1.xpose.msra.mxu0 %v1622
        %1715 = vmatprep.subr.mxu0 0.0
        %1716 = vmatpush1.xpose.msra.mxu0 %v1625
        %1717 = vmatprep.subr.mxu0 0.0
        %1718 = vmatpush1.xpose.msra.mxu0 %v1628
        %1719 = vmatprep.subr.mxu0 0.0
        %1720 = vmatpush1.xpose.msra.mxu0 %v1631
        %1721 = vmatprep.subr.mxu0 0.0
        %1722 = vmatpush1.xpose.msra.mxu0 %v1634
        %1723 = vmatprep.subr.mxu0 0.0
        %1724 = vmatpush1.xpose.msra.mxu0 %v1637
        %1725 = vmatprep.subr.mxu0 0.0
        %1726 = vmatpush1.xpose.msra.mxu0 %v1640
        %1727 = vmatprep.subr.mxu0 0.0
        %1728 = vmatpush1.xpose.msra.mxu0 %v1643
        %1729 = vmatprep.subr.mxu0 0.0
        %1730 = vmatpush1.xpose.msra.mxu0 %v1646
        %1731 = vmatprep.subr.mxu0 0.0
        %1732 = vmatpush1.xpose.msra.mxu0 %v1649
        %1733 = vmatprep.subr.mxu0 0.0
        %1734 = vmatpush1.xpose.msra.mxu0 %v1652
        %1735 = vmatprep.subr.mxu0 0.0
        %1736 = vmatpush1.xpose.msra.mxu0 %v1655
        %1737 = vmatprep.subr.mxu0 0.0
        %1738 = vmatpush1.xpose.msra.mxu0 %v1658
        %1739 = vmatprep.subr.mxu0 0.0
        %1740 = vmatpush1.xpose.msra.mxu0 %v1661
        %1741 = vmatprep.subr.mxu0 0.0
        %1742 = vmatpush1.xpose.msra.mxu0 %v1664
        %1743 = vmatprep.subr.mxu0 0.0
        %1744 = vmatpush1.xpose.msra.mxu0 %v1667
        %1745 = vmatprep.subr.mxu0 0.0
        %1746 = vmatpush1.xpose.msra.mxu0 %v1670
        %1747 = vmatprep.subr.mxu0 0.0
        %1748 = vmatpush1.xpose.msra.mxu0 %v1673
        %1749 = vmatprep.subr.mxu0 0.0
        %1750 = vmatpush1.xpose.msra.mxu0 %v1676
        %1751 = vmatprep.subr.mxu0 0.0
        %1752 = vmatpush1.xpose.msra.mxu0 %v1679
        %1753 = vmatprep.subr.mxu0 0.0
        %1754 = vmatpush1.xpose.msra.mxu0 %v1682
        %1755 = vmatprep.subr.mxu0 0.0
        %1756 = vmatpush1.xpose.msra.mxu0 %v1685
        %1757 = vmatprep.subr.mxu0 0.0
        %1758 = vmatpush1.xpose.msra.mxu0 %v1688
        %1759 = vmatprep.subr.mxu0 0.0
        %1760 = vmatpush1.xpose.msra.mxu0 %v1691
        %1761 = vmatprep.subr.mxu0 0.0
        %1762 = vmatpush1.xpose.msra.mxu0 %v1694
        %1763 = vmatprep.subr.mxu0 0.0
        %1764 = vmatpush1.xpose.msra.mxu0 %v1697
        %1765 = vmatprep.subr.mxu0 0.0
        %1766 = vmatpush1.xpose.msra.mxu0 %v1700
        %1767 = vmatprep.subr.mxu0 0.0
        %1768 = vmatpush1.xpose.msra.mxu0 %v1703
        %1769 = vmatprep.mubr.f32.mxu0 0.0
        %1770 = vmatmul.mubr.f32.gmra.mrb[0].mxu0 %v1607
        %v1771 = vpop.f32.mrb[0].mxu0
        %v1772 = vadd.f32 0.0, %v1771
        %v1773 = vpop.f32.mrb[0].mxu0
        %v1774 = vadd.f32 0.0, %v1773
        %1775 = vdwg.mxu0
        %v1776 = vld [vmem:[#allocation2] sm:$0x1]
        %1778 = vset.pattern.permute.xlu0 0
        %1779 = vperm.xlu0 %1778, %v1776
        %v1780 = vpop.permute.xlu0 %1779
        %v1782 = vlaneseq
        %v1783 = vshrl.u32 %v1782, 7
        %v1784 = vsub.s32 0, %v1783
        %v1785 = vrot.slane %v1780, %v1784
        %v1786 = vadd.f32 %v1772, %v1785
        %v1787 = vadd.f32 %v1774, %v1785
        %v1790 = vcombine.low %v1786, %v1787
        %v1792 = vunpack.c.l.s4 1966171168
        %v1793 = vunpack.c.0.s8 %v1792
        %v1794 = vlaneseq
        %v1795 = vshrl.u32 %v1794, 7
        %v1796 = vsub.s32 %v1793, %v1795
        %v1797 = vrot.slane %v1790, %v1796
        %v1799 = vunpack.c.l.s4 1966171168
        %v1800 = vunpack.c.0.s8 %v1799
        %v1801 = vlaneseq
        %v1802 = vshrl.u32 %v1801, 7
        %v1803 = vsub.s32 %v1800, %v1802
        %v1804 = vrot.slane %v1797, %v1803
        %v1806 = vlaneseq
        %vm1807 = vcmp.ge.s32.totalorder %v1806, 0
        %vm1808 = vcmp.lt.s32.totalorder %v1806, 256
        %vm1809 = vmand %vm1807, %vm1808
        %1810 = vst.msk [vmem:[%s328] sm:$0x3] %vm1809, %v1804
        %s1811 = sand.u32 %s227, 1
        %s1812 = scalar_lea.sflag [#allocation4], %s1811
        %s1813 = sand.u32 %s227, 1
        %s1814 = smul.addr %s1813, 2
        %s1815 = scalar_lea.vmem [#allocation3], %s1814
        // Predicated region
        $region57: #{tpu_custom_call.1} parent=55 // pred_check
          %p1816 = pneg %p237
        $region58: #{tpu_custom_call.1} parent=55 // pred_check_branch
          %1818 = sbr.rel (%p1816) target = $region60
        $region59: #{tpu_custom_call.1} parent=55 // pred_region
          %s1820 = ssub.s32 32, 32
          %1821 = vsyncadd %s1812, %s1820
          %s1822 = smul.addr %s25, 2
          %s1823 = smul.addr %s1822, 16
          %s1824 = scalar_lea.hbm %s9, %s1823
          %s1826 = sshll.u32 %s1815, 4
          %s1827 = int_to_ptr.vmem [resolvable:$true] %s1826
          %1829 = dma.vmem_to_hbm [thread:$0]  %s1827, 32, %s1824, %s1812
        $region60: #{tpu_custom_call.1} parent=55 // pred_fallthru
          _
      $region56: #{tpu_custom_call.1} parent=5 // pred_fallthru
        _
      %p1830 = scmp.le.s32.totalorder 2, %s20
      // Predicated region
      $region61: #{tpu_custom_call.1} parent=5 // pred_check
        %p1831 = pneg %p1830
      $region62: #{tpu_custom_call.1} parent=5 // pred_check_branch
        %1833 = sbr.rel (%p1831) target = $region64
      $region63: #{tpu_custom_call.1} parent=5 // pred_region
        %s1834 = ssub.s32 %s20, 2
        // Predicated region
        $region65: #{tpu_custom_call.1} parent=63 // pred_check
          %p1835 = pneg %p243
        $region66: #{tpu_custom_call.1} parent=63 // pred_check_branch
          %1837 = sbr.rel (%p1835) target = $region68
        $region67: #{tpu_custom_call.1} parent=63 // pred_region
          %s1838 = sand.u32 %s228, 1
          %s1839 = scalar_lea.sflag [#allocation4], %s1838
          %s1840 = sand.u32 %s228, 1
          %s1841 = smul.addr %s1840, 2
          %s1842 = scalar_lea.vmem [#allocation3], %s1841
          %1843 = dma.done %s1839, 32
        $region68: #{tpu_custom_call.1} parent=63 // pred_fallthru
          _
      $region64: #{tpu_custom_call.1} parent=5 // pred_fallthru
        _
    $region6: #{tpu_custom_call.1} parent=1 // loop_footer
      %s24 = sadd.s32 1, %s20
    $region7: #{tpu_custom_call.1} parent=1 // loop_footer_branch
      %19 = sbr.rel target = $region3
    $region8: #{tpu_custom_call.1} parent=1 // loop_exit
      _
    %1844 = vsyncpa [#allocation4], 1
    %s1845 = scalar_lea.sflag [#allocation4], 1
    %1846 = vsyncpa %s1845, 1

</llo_original>
